<compile_context>
chip_gen: v6e
topology: v6e:2x2x1
jax: 0.10.0
libtpu: 0.0.40
codegen_flags: <defaults>
</compile_context>

<pallas_src>
import functools

import jax
import jax.numpy as jnp
import numpy as np
from jax import lax
from jax.experimental import pallas as pl
from jax.experimental.pallas import tpu as pltpu

# TODO(synk): the real mmseg model architecture comes from an external config;
# a minimal conv+ReLU+1x1-conv segmentor is synthesized in-script instead.

# ---- synthetic "mmseg model" configuration -----------------------------------
N = 2            # batch
CIN = 3          # input channels (RGB-like)
H = W = 16       # spatial
CH = 8           # backbone hidden channels
NUM_CLASSES = 4  # decode-head output channels
KH = KW = 3      # backbone conv kernel


def _seg_kernel(x_ref, p_ref, o_ref, *, n_img, h, w, kh, kw, ch, nc,
                kdim, w2_off, b2_off):
    """Fused 3x3 conv + ReLU + 1x1 conv, batch folded onto lanes.

    x_ref : (N, CIN, H*W)          NCHW input with spatial flattened onto lanes
    p_ref : (8, 128) packed params:
              [:ch, :kdim]             -> [per-tap backbone weights | b1]
              [:nc, w2_off:w2_off+ch]  -> decode-head weight, transposed
              [:nc, b2_off]            -> decode-head bias
    o_ref : (N*NUM_CLASSES, H*W)   logits; reshapes straight to NCHW
    """
    hw = h * w
    nhw = n_img * hw

    # Fold batch onto lanes: (CIN, N*HW). 256-lane image slabs are vreg-aligned.
    x = jnp.concatenate([x_ref[i] for i in range(n_img)], axis=1)

    # Per-image position / column (for border-validity masks). W and H*W are
    # powers of two here -> bitwise-and instead of vector integer rem.
    pos = lax.broadcasted_iota(jnp.int32, (1, nhw), 1)
    if hw & (hw - 1) == 0:
        pimg = jnp.bitwise_and(pos, hw - 1)
    else:
        pimg = lax.rem(pos, jnp.int32(hw))
    if w & (w - 1) == 0:
        col = jnp.bitwise_and(pos, w - 1)
    else:
        col = lax.rem(pos, jnp.int32(w))

    # Stack the 9 shifted+masked taps (plus a ones row folding b1) along the
    # sublane/contraction axis: (kh*kw*CIN + 1, N*HW).  Each shift is a lane
    # rotation (XLU); wrapped lanes coincide exactly with zero-padding
    # positions of the same image, so the border mask alone is sufficient.
    taps = []
    for t in range(kh * kw):
        sy = t // kw - kh // 2
        sx = t % kw - kw // 2
        shift = sy * w + sx                       # source pixel = p + shift
        if shift == 0:
            shifted = x
        else:
            shifted = pltpu.roll(x, shift=(-shift) % nhw, axis=1)
        conds = []
        if sy < 0:
            conds.append(pimg >= (-sy) * w)       # row >= -sy
        if sy > 0:
            conds.append(pimg < (h - sy) * w)     # row <  H - sy
        if sx < 0:
            conds.append(col >= -sx)              # col >= -sx
        if sx > 0:
            conds.append(col < w - sx)            # col <  W - sx
        mask = None
        for c in conds:
            mask = c if mask is None else (mask & c)
        taps.append(shifted if mask is None else jnp.where(mask, shifted, 0.0))
    taps.append(jnp.ones((1, nhw), jnp.float32))  # bias row (folds b1)
    tap_mat = jnp.concatenate(taps, axis=0)       # (kdim, N*HW)

    params = p_ref[...]                           # single (8,128) VMEM load
    w1b = params[:ch, :kdim]                      # (CH, kdim)   [taps | b1]
    w2t = params[:nc, w2_off:w2_off + ch]         # (NC, CH)
    b2 = params[:nc, b2_off:b2_off + 1]           # (NC, 1)

    # One fused backbone contraction (b1 folded in) + ReLU.
    hidden = jnp.maximum(
        jnp.dot(w1b, tap_mat, precision=lax.Precision.HIGHEST,
                preferred_element_type=jnp.float32), 0.0)       # (CH, N*HW)
    # Decode-head 1x1 conv.
    logits = jnp.dot(w2t, hidden, precision=lax.Precision.HIGHEST,
                     preferred_element_type=jnp.float32) + b2   # (NC, N*HW)

    # Re-slab to (N*NC, HW): the per-image lane slices are at 256-lane
    # (vreg-aligned) boundaries, and the final store is two full unmasked
    # (8,128) tiles.
    out = jnp.concatenate(
        [logits[:, i * hw:(i + 1) * hw] for i in range(n_img)], axis=0)
    o_ref[...] = out.astype(o_ref.dtype)


def mmseg_forward_dummy(x_nchw, w1, b1, w2, b2):
    """Pallas implementation of MMSEGPyTorchWrapper.forward (forward_dummy).

    x_nchw: (N, CIN, H, W) float32
    w1:     (KH, KW, CIN, CH)  backbone 3x3 conv weight (HWIO)
    b1:     (CH,)
    w2:     (CH, NUM_CLASSES)  decode-head 1x1 conv weight
    b2:     (NUM_CLASSES,)
    returns (N, NUM_CLASSES, H, W) float32 (PyTorch NCHW convention)
    """
    n, cin, h, w = x_nchw.shape
    kh, kw = w1.shape[0], w1.shape[1]
    ch = w1.shape[-1]
    nc = w2.shape[-1]
    hw = h * w
    ntaps = kh * kw
    kdim = ntaps * cin + 1            # stacked taps + bias row

    # Glue is reshape / tiny weight relayout only: no activation transposes,
    # no jnp.pad (padding halo handled in-kernel via roll + masks).
    x_flat = x_nchw.reshape(n, cin, hw).astype(jnp.float32)

    # Pack all parameters into ONE padded (8,128) f32 block -> one small DMA.
    w2_off = ((kdim + 7) // 8) * 8
    b2_off = w2_off + ch
    p_rows = max(8, ch, nc)
    p_cols = max(128, ((b2_off + 1 + 127) // 128) * 128)
    # w1_big[k, t*cin + c] = w1[dy, dx, c, k]; last column = b1
    w1_big = jnp.transpose(w1.reshape(ntaps, cin, ch), (2, 0, 1))
    w1_big = w1_big.reshape(ch, ntaps * cin)
    w1_big = jnp.concatenate([w1_big, b1.reshape(ch, 1)], axis=1)   # (CH, kdim)
    params = jnp.zeros((p_rows, p_cols), jnp.float32)
    params = params.at[:ch, :kdim].set(w1_big.astype(jnp.float32))
    params = params.at[:nc, w2_off:w2_off + ch].set(
        jnp.transpose(w2, (1, 0)).astype(jnp.float32))
    params = params.at[:nc, b2_off].set(b2.astype(jnp.float32))

    kernel = functools.partial(
        _seg_kernel, n_img=n, h=h, w=w, kh=kh, kw=kw, ch=ch, nc=nc,
        kdim=kdim, w2_off=w2_off, b2_off=b2_off)

    out_flat = pl.pallas_call(
        kernel,
        out_shape=jax.ShapeDtypeStruct((n * nc, hw), jnp.float32),
        grid_spec=pltpu.PrefetchScalarGridSpec(
            num_scalar_prefetch=0,
            grid=(1,),                            # fixed-overhead bound: 1 step
            in_specs=[
                pl.BlockSpec((n, cin, hw), lambda i: (0, 0, 0)),
                pl.BlockSpec((p_rows, p_cols), lambda i: (0, 0)),
            ],
            out_specs=pl.BlockSpec((n * nc, hw), lambda i: (0, 0)),
        ),
        compiler_params=pltpu.CompilerParams(
            dimension_semantics=("arbitrary",)),
    )(x_flat, params)

    # (N*NC, HW) -> (N, NC, H, W): pure reshape, already NCHW-ordered.
    return out_flat.reshape(n, nc, h, w)


def _reference(x_nchw, w1, b1, w2, b2):
    """Pure-JAX reference (lax.conv) for correctness checking."""
    x_nhwc = jnp.transpose(x_nchw, (0, 2, 3, 1))
    hid = lax.conv_general_dilated(
        x_nhwc, w1, window_strides=(1, 1), padding="SAME",
        dimension_numbers=("NHWC", "HWIO", "NHWC"),
        precision=lax.Precision.HIGHEST)
    hid = jnp.maximum(hid + b1, 0.0)
    logits = jnp.einsum("nhwc,ck->nhwk", hid, w2,
                        precision=lax.Precision.HIGHEST) + b2
    return jnp.transpose(logits, (0, 3, 1, 2))


if __name__ == "__main__":
    key = jax.random.PRNGKey(0)
    kx, k1, k2, k3, k4 = jax.random.split(key, 5)

    # deterministic example input and parameters
    x = jax.random.normal(kx, (N, CIN, H, W), dtype=jnp.float32)
    w1 = jax.random.normal(k1, (KH, KW, CIN, CH), dtype=jnp.float32) * 0.1
    b1 = jax.random.normal(k2, (CH,), dtype=jnp.float32) * 0.1
    w2 = jax.random.normal(k3, (CH, NUM_CLASSES), dtype=jnp.float32) * 0.1
    b2 = jax.random.normal(k4, (NUM_CLASSES,), dtype=jnp.float32) * 0.1

    out = jax.block_until_ready(mmseg_forward_dummy(x, w1, b1, w2, b2))
    ref = jax.block_until_ready(_reference(x, w1, b1, w2, b2))

    assert out.shape == (N, NUM_CLASSES, H, W), out.shape
    np.testing.assert_allclose(np.asarray(out), np.asarray(ref),
                               rtol=1e-4, atol=1e-4)

    print("KERNEL_OK")
</pallas_src>

<mosaic_0001>
module attributes {stable_mosaic.version = 11 : i64} {
  func.func @_seg_kernel(%arg0: i32, %arg1: memref<2x3x256xf32, #tpu.memory_space<vmem>>, %arg2: memref<8x128xf32, #tpu.memory_space<vmem>>, %arg3: memref<8x256xf32, #tpu.memory_space<vmem>>) attributes {dimension_semantics = [#tpu.dimension_semantics<arbitrary>], iteration_bounds = array<i64: 1>, scalar_prefetch = 0 : i64, scratch_operands = 0 : i64, tpu.core_type = #tpu.core_type<tc>, window_params = [{pipeline_mode = #tpu.pipeline_mode<synchronous>, transform_indices = @transform_0, window_bounds = array<i64: 2, 3, 256>}, {pipeline_mode = #tpu.pipeline_mode<synchronous>, transform_indices = @transform_1, window_bounds = array<i64: 8, 128>}, {pipeline_mode = #tpu.pipeline_mode<synchronous>, transform_indices = @transform_2, window_bounds = array<i64: 8, 256>}]} {
    %c0 = arith.constant 0 : index
    %c0_0 = arith.constant 0 : index
    %c0_1 = arith.constant 0 : index
    %0 = vector.load %arg1[%c0, %c0_0, %c0_1] : memref<2x3x256xf32, #tpu.memory_space<vmem>>, vector<1x3x256xf32>
    %1 = vector.shape_cast %0 : vector<1x3x256xf32> to vector<3x256xf32>
    %c1 = arith.constant 1 : index
    %c0_2 = arith.constant 0 : index
    %c0_3 = arith.constant 0 : index
    %2 = vector.load %arg1[%c1, %c0_2, %c0_3] : memref<2x3x256xf32, #tpu.memory_space<vmem>>, vector<1x3x256xf32>
    %3 = vector.shape_cast %2 : vector<1x3x256xf32> to vector<3x256xf32>
    %4 = tpu.concatenate %1, %3 in 1 : vector<3x256xf32>, vector<3x256xf32> -> vector<3x512xf32>
    %5 = tpu.iota {dimensions = array<i32: 1>} : vector<1x512xi32>
    %c255_i32 = arith.constant 255 : i32
    %6 = vector.broadcast %c255_i32 : i32 to vector<1x512xi32>
    %7 = arith.andi %5, %6 : vector<1x512xi32>
    %c15_i32 = arith.constant 15 : i32
    %8 = vector.broadcast %c15_i32 : i32 to vector<1x512xi32>
    %9 = arith.andi %5, %8 : vector<1x512xi32>
    %c17_i32 = arith.constant 17 : i32
    %10 = tpu.dynamic_rotate %4 by %c17_i32 dim 1 : vector<3x512xf32>, i32 -> vector<3x512xf32>
    %c16_i32 = arith.constant 16 : i32
    %11 = vector.broadcast %c16_i32 : i32 to vector<1x512xi32>
    %12 = arith.cmpi sge, %7, %11 : vector<1x512xi32>
    %c1_i32 = arith.constant 1 : i32
    %13 = vector.broadcast %c1_i32 : i32 to vector<1x512xi32>
    %14 = arith.cmpi sge, %9, %13 : vector<1x512xi32>
    %15 = arith.andi %12, %14 : vector<1x512xi1>
    %cst = arith.constant 0.000000e+00 : f32
    %16 = vector.shape_cast %15 : vector<1x512xi1> to vector<1x512xi1>
    %17 = vector.broadcast %16 : vector<1x512xi1> to vector<3x512xi1>
    %18 = vector.broadcast %cst : f32 to vector<3x512xf32>
    %19 = arith.select %17, %10, %18 : vector<3x512xi1>, vector<3x512xf32>
    %c16_i32_4 = arith.constant 16 : i32
    %20 = tpu.dynamic_rotate %4 by %c16_i32_4 dim 1 : vector<3x512xf32>, i32 -> vector<3x512xf32>
    %c16_i32_5 = arith.constant 16 : i32
    %21 = vector.broadcast %c16_i32_5 : i32 to vector<1x512xi32>
    %22 = arith.cmpi sge, %7, %21 : vector<1x512xi32>
    %cst_6 = arith.constant 0.000000e+00 : f32
    %23 = vector.shape_cast %22 : vector<1x512xi1> to vector<1x512xi1>
    %24 = vector.broadcast %23 : vector<1x512xi1> to vector<3x512xi1>
    %25 = vector.broadcast %cst_6 : f32 to vector<3x512xf32>
    %26 = arith.select %24, %20, %25 : vector<3x512xi1>, vector<3x512xf32>
    %c15_i32_7 = arith.constant 15 : i32
    %27 = tpu.dynamic_rotate %4 by %c15_i32_7 dim 1 : vector<3x512xf32>, i32 -> vector<3x512xf32>
    %c16_i32_8 = arith.constant 16 : i32
    %28 = vector.broadcast %c16_i32_8 : i32 to vector<1x512xi32>
    %29 = arith.cmpi sge, %7, %28 : vector<1x512xi32>
    %c15_i32_9 = arith.constant 15 : i32
    %30 = vector.broadcast %c15_i32_9 : i32 to vector<1x512xi32>
    %31 = arith.cmpi slt, %9, %30 : vector<1x512xi32>
    %32 = arith.andi %29, %31 : vector<1x512xi1>
    %cst_10 = arith.constant 0.000000e+00 : f32
    %33 = vector.shape_cast %32 : vector<1x512xi1> to vector<1x512xi1>
    %34 = vector.broadcast %33 : vector<1x512xi1> to vector<3x512xi1>
    %35 = vector.broadcast %cst_10 : f32 to vector<3x512xf32>
    %36 = arith.select %34, %27, %35 : vector<3x512xi1>, vector<3x512xf32>
    %c1_i32_11 = arith.constant 1 : i32
    %37 = tpu.dynamic_rotate %4 by %c1_i32_11 dim 1 : vector<3x512xf32>, i32 -> vector<3x512xf32>
    %c1_i32_12 = arith.constant 1 : i32
    %38 = vector.broadcast %c1_i32_12 : i32 to vector<1x512xi32>
    %39 = arith.cmpi sge, %9, %38 : vector<1x512xi32>
    %cst_13 = arith.constant 0.000000e+00 : f32
    %40 = vector.shape_cast %39 : vector<1x512xi1> to vector<1x512xi1>
    %41 = vector.broadcast %40 : vector<1x512xi1> to vector<3x512xi1>
    %42 = vector.broadcast %cst_13 : f32 to vector<3x512xf32>
    %43 = arith.select %41, %37, %42 : vector<3x512xi1>, vector<3x512xf32>
    %c511_i32 = arith.constant 511 : i32
    %44 = tpu.dynamic_rotate %4 by %c511_i32 dim 1 : vector<3x512xf32>, i32 -> vector<3x512xf32>
    %c15_i32_14 = arith.constant 15 : i32
    %45 = vector.broadcast %c15_i32_14 : i32 to vector<1x512xi32>
    %46 = arith.cmpi slt, %9, %45 : vector<1x512xi32>
    %cst_15 = arith.constant 0.000000e+00 : f32
    %47 = vector.shape_cast %46 : vector<1x512xi1> to vector<1x512xi1>
    %48 = vector.broadcast %47 : vector<1x512xi1> to vector<3x512xi1>
    %49 = vector.broadcast %cst_15 : f32 to vector<3x512xf32>
    %50 = arith.select %48, %44, %49 : vector<3x512xi1>, vector<3x512xf32>
    %c497_i32 = arith.constant 497 : i32
    %51 = tpu.dynamic_rotate %4 by %c497_i32 dim 1 : vector<3x512xf32>, i32 -> vector<3x512xf32>
    %c240_i32 = arith.constant 240 : i32
    %52 = vector.broadcast %c240_i32 : i32 to vector<1x512xi32>
    %53 = arith.cmpi slt, %7, %52 : vector<1x512xi32>
    %c1_i32_16 = arith.constant 1 : i32
    %54 = vector.broadcast %c1_i32_16 : i32 to vector<1x512xi32>
    %55 = arith.cmpi sge, %9, %54 : vector<1x512xi32>
    %56 = arith.andi %53, %55 : vector<1x512xi1>
    %cst_17 = arith.constant 0.000000e+00 : f32
    %57 = vector.shape_cast %56 : vector<1x512xi1> to vector<1x512xi1>
    %58 = vector.broadcast %57 : vector<1x512xi1> to vector<3x512xi1>
    %59 = vector.broadcast %cst_17 : f32 to vector<3x512xf32>
    %60 = arith.select %58, %51, %59 : vector<3x512xi1>, vector<3x512xf32>
    %c496_i32 = arith.constant 496 : i32
    %61 = tpu.dynamic_rotate %4 by %c496_i32 dim 1 : vector<3x512xf32>, i32 -> vector<3x512xf32>
    %c240_i32_18 = arith.constant 240 : i32
    %62 = vector.broadcast %c240_i32_18 : i32 to vector<1x512xi32>
    %63 = arith.cmpi slt, %7, %62 : vector<1x512xi32>
    %cst_19 = arith.constant 0.000000e+00 : f32
    %64 = vector.shape_cast %63 : vector<1x512xi1> to vector<1x512xi1>
    %65 = vector.broadcast %64 : vector<1x512xi1> to vector<3x512xi1>
    %66 = vector.broadcast %cst_19 : f32 to vector<3x512xf32>
    %67 = arith.select %65, %61, %66 : vector<3x512xi1>, vector<3x512xf32>
    %c495_i32 = arith.constant 495 : i32
    %68 = tpu.dynamic_rotate %4 by %c495_i32 dim 1 : vector<3x512xf32>, i32 -> vector<3x512xf32>
    %c240_i32_20 = arith.constant 240 : i32
    %69 = vector.broadcast %c240_i32_20 : i32 to vector<1x512xi32>
    %70 = arith.cmpi slt, %7, %69 : vector<1x512xi32>
    %c15_i32_21 = arith.constant 15 : i32
    %71 = vector.broadcast %c15_i32_21 : i32 to vector<1x512xi32>
    %72 = arith.cmpi slt, %9, %71 : vector<1x512xi32>
    %73 = arith.andi %70, %72 : vector<1x512xi1>
    %cst_22 = arith.constant 0.000000e+00 : f32
    %74 = vector.shape_cast %73 : vector<1x512xi1> to vector<1x512xi1>
    %75 = vector.broadcast %74 : vector<1x512xi1> to vector<3x512xi1>
    %76 = vector.broadcast %cst_22 : f32 to vector<3x512xf32>
    %77 = arith.select %75, %68, %76 : vector<3x512xi1>, vector<3x512xf32>
    %cst_23 = arith.constant 1.000000e+00 : f32
    %78 = vector.broadcast %cst_23 : f32 to vector<1x512xf32>
    %79 = tpu.concatenate %19, %26, %36, %43, %4, %50, %60, %67, %77, %78 in 0 : vector<3x512xf32>, vector<3x512xf32>, vector<3x512xf32>, vector<3x512xf32>, vector<3x512xf32>, vector<3x512xf32>, vector<3x512xf32>, vector<3x512xf32>, vector<3x512xf32>, vector<1x512xf32> -> vector<28x512xf32>
    %c0_24 = arith.constant 0 : index
    %c0_25 = arith.constant 0 : index
    %80 = vector.load %arg2[%c0_24, %c0_25] : memref<8x128xf32, #tpu.memory_space<vmem>>, vector<8x128xf32>
    %81 = vector.extract_strided_slice %80 {offsets = [0, 0], sizes = [8, 28], strides = [1, 1]} : vector<8x128xf32> to vector<8x28xf32>
    %82 = vector.extract_strided_slice %80 {offsets = [0, 32], sizes = [4, 8], strides = [1, 1]} : vector<8x128xf32> to vector<4x8xf32>
    %83 = vector.extract_strided_slice %80 {offsets = [0, 40], sizes = [4, 1], strides = [1, 1]} : vector<8x128xf32> to vector<4x1xf32>
    %cst_26 = arith.constant dense<0.000000e+00> : vector<8x512xf32>
    %84 = tpu.matmul %81, %79, %cst_26 {dimension_numbers = #tpu.dot_dimension_numbers<[1], [0], [0], [1], [0, 0, 1, 1], [], []>, precision = #tpu.contract_precision<fp32>} : vector<8x28xf32>, vector<28x512xf32>, vector<8x512xf32> -> vector<8x512xf32>
    %cst_27 = arith.constant 0.000000e+00 : f32
    %85 = vector.broadcast %cst_27 : f32 to vector<8x512xf32>
    %86 = arith.maximumf %84, %85 : vector<8x512xf32>
    %cst_28 = arith.constant dense<0.000000e+00> : vector<4x512xf32>
    %87 = tpu.matmul %82, %86, %cst_28 {dimension_numbers = #tpu.dot_dimension_numbers<[1], [0], [0], [1], [0, 0, 1, 1], [], []>, precision = #tpu.contract_precision<fp32>} : vector<4x8xf32>, vector<8x512xf32>, vector<4x512xf32> -> vector<4x512xf32>
    %88 = vector.broadcast %83 : vector<4x1xf32> to vector<4x512xf32>
    %89 = arith.addf %87, %88 : vector<4x512xf32>
    %90 = vector.extract_strided_slice %89 {offsets = [0, 0], sizes = [4, 256], strides = [1, 1]} : vector<4x512xf32> to vector<4x256xf32>
    %91 = vector.extract_strided_slice %89 {offsets = [0, 256], sizes = [4, 256], strides = [1, 1]} : vector<4x512xf32> to vector<4x256xf32>
    %92 = tpu.concatenate %90, %91 in 0 : vector<4x256xf32>, vector<4x256xf32> -> vector<8x256xf32>
    %c0_29 = arith.constant 0 : index
    %c0_30 = arith.constant 0 : index
    %93 = vector.load %arg3[%c0_29, %c0_30] : memref<8x256xf32, #tpu.memory_space<vmem>>, vector<8x256xf32>
    tpu.vector_store %arg3[%c0_29, %c0_30], %92 {strides = array<i32>} : memref<8x256xf32, #tpu.memory_space<vmem>>, vector<8x256xf32>,
    return
  }
  func.func @transform_0(%arg0: i32) -> (i32, i32, i32) {
    %c0_i32 = arith.constant 0 : i32
    %c0_i32_0 = arith.constant 0 : i32
    %c0_i32_1 = arith.constant 0 : i32
    %c0_i32_2 = arith.constant 0 : i32
    return %c0_i32, %c0_i32_0, %c0_i32_1 : i32, i32, i32
  }
  func.func @transform_1(%arg0: i32) -> (i32, i32) {
    %c0_i32 = arith.constant 0 : i32
    %c0_i32_0 = arith.constant 0 : i32
    %c0_i32_1 = arith.constant 0 : i32
    return %c0_i32, %c0_i32_0 : i32, i32
  }
  func.func @transform_2(%arg0: i32) -> (i32, i32) {
    %c0_i32 = arith.constant 0 : i32
    %c0_i32_0 = arith.constant 0 : i32
    %c0_i32_1 = arith.constant 0 : i32
    return %c0_i32, %c0_i32_0 : i32, i32
  }
}

</mosaic_0001>

<llo_original>
// kernel: tpu_custom_call.1
$region0: #{tpu_custom_call.1}
  #allocation0 [shape = 'u32[]', space=smem, size = 0x4, offset = 0x4, fixed_abs, tag = 'smem constant byte address 0x4 - core index']
  #allocation1 [shape = 'u32[144,128]{1,0:T(1,128)}', space=vmem, size = 0x12000, scoped, tag = 'internal scratch']
  %s0 = inlined_call_operand.vmem [shape: f32[2,3,256], index: 0, kind: input, shape index: {}]
  %s1 = inlined_call_operand.vmem [shape: f32[8,128], index: 1, kind: input, shape index: {}]
  %s2 = inlined_call_operand.hbm [shape: f32[8,256], index: 2, kind: output, shape index: {}]
  %s3 = sld [smem:[#allocation0]]
  $region18: #{tpu_custom_call.1} parent=0
    _
  %s5 = ssub.s32 1, %s3
  %s6 = scalar_select 0, %s5, %s3
  $region1: #{tpu_custom_call.1} parent=0
    #allocation2 [shape = 'u8[8192]{0}', space=vmem, size = 0x2000, scoped, tag = 'output window, operand 0, single buffered']
    #allocation3 [shape = 's32[1]{0}', space=sflag, size = 0x4, scoped, tag = 'scoped memory for tpu_custom_call.1']
    %7 = vsyncpa [#allocation3], 0
    // Predicated region
    $region2: #{tpu_custom_call.1} parent=1 // pred_check
      _
    $region3: #{tpu_custom_call.1} parent=1 // pred_check_branch
      %9 = sbr.rel (0) target = $region5
    $region4: #{tpu_custom_call.1} parent=1 // pred_region
      _
    $region5: #{tpu_custom_call.1} parent=1 // pred_fallthru
      _
    // Predicated region
    $region6: #{tpu_custom_call.1} parent=1 // pred_check
      _
    $region7: #{tpu_custom_call.1} parent=1 // pred_check_branch
      %11 = sbr.rel (0) target = $region9
    $region8: #{tpu_custom_call.1} parent=1 // pred_region
      _
    $region9: #{tpu_custom_call.1} parent=1 // pred_fallthru
      _
    %v12 = vld [vmem:[%s0] sm:$0x77]
    %s13 = scalar_lea.vmem %s0, 8
    %v14 = vld [vmem:[%s13] sm:$0x77]
    %v16 = vcombine.high %v12, %v12
    %v19 = vcombine.high %v14, %v14
    %v21 = vlaneseq
    %v22 = vand.u32 %v21, 127
    %v23 = vadd.s32 %v22, 128
    %v24 = vadd.s32 %v22, 256
    %v25 = vadd.s32 %v22, 384
    %v26 = vand.u32 %v22, 255
    %v27 = vand.u32 %v23, 255
    %v28 = vand.u32 %v24, 255
    %v29 = vand.u32 %v25, 255
    %v30 = vand.u32 %v22, 15
    %v31 = vand.u32 %v23, 15
    %v32 = vand.u32 %v24, 15
    %v33 = vand.u32 %v25, 15
    %34 = vrot.lane.b32.xlu0 %v12, 17
    %v35 = vpop.permute.xlu0 %34
    %36 = vrot.lane.b32.xlu0 %v16, 17
    %v37 = vpop.permute.xlu0 %36
    %38 = vrot.lane.b32.xlu0 %v14, 17
    %v39 = vpop.permute.xlu0 %38
    %40 = vrot.lane.b32.xlu0 %v19, 17
    %v41 = vpop.permute.xlu0 %40
    %vm42 = vcmp.lt.s32.totalorder %v22, 17
    %v43 = vsel %vm42, %v39, %v41
    %v44 = vsel %vm42, %v37, %v39
    %v45 = vsel %vm42, %v35, %v37
    %v46 = vsel %vm42, %v41, %v35
    %vm47 = vcmp.ge.s32.totalorder %v26, 16
    %vm48 = vcmp.ge.s32.totalorder %v27, 16
    %vm49 = vcmp.ge.s32.totalorder %v28, 16
    %vm50 = vcmp.ge.s32.totalorder %v29, 16
    %vm51 = vcmp.ge.s32.totalorder %v30, 1
    %vm52 = vcmp.ge.s32.totalorder %v31, 1
    %vm53 = vcmp.ge.s32.totalorder %v32, 1
    %vm54 = vcmp.ge.s32.totalorder %v33, 1
    %vm55 = vmand %vm47, %vm51
    %vm56 = vmand %vm48, %vm52
    %vm57 = vmand %vm49, %vm53
    %vm58 = vmand %vm50, %vm54
    %v59 = vsel %vm55, 1, 0
    %v60 = vsel %vm56, 1, 0
    %v61 = vsel %vm57, 1, 0
    %v62 = vsel %vm58, 1, 0
    %vm63 = vcmp.eq.s32.totalorder %v59, 1
    %vm64 = vcmp.eq.s32.totalorder %v60, 1
    %vm65 = vcmp.eq.s32.totalorder %v61, 1
    %vm66 = vcmp.eq.s32.totalorder %v62, 1
    %v67 = vsel %vm63, %v46, 0.0
    %v68 = vsel %vm64, %v45, 0.0
    %v69 = vsel %vm65, %v44, 0.0
    %v70 = vsel %vm66, %v43, 0.0
    %71 = vrot.lane.b32.xlu0 %v12, 16
    %v72 = vpop.permute.xlu0 %71
    %73 = vrot.lane.b32.xlu0 %v16, 16
    %v74 = vpop.permute.xlu0 %73
    %75 = vrot.lane.b32.xlu0 %v14, 16
    %v76 = vpop.permute.xlu0 %75
    %77 = vrot.lane.b32.xlu0 %v19, 16
    %v78 = vpop.permute.xlu0 %77
    %vm79 = vcmp.lt.s32.totalorder %v22, 16
    %v80 = vsel %vm79, %v76, %v78
    %v81 = vsel %vm79, %v74, %v76
    %v82 = vsel %vm79, %v72, %v74
    %v83 = vsel %vm79, %v78, %v72
    %v84 = vsel %vm47, 1, 0
    %v85 = vsel %vm48, 1, 0
    %v86 = vsel %vm49, 1, 0
    %v87 = vsel %vm50, 1, 0
    %vm88 = vcmp.eq.s32.totalorder %v84, 1
    %vm89 = vcmp.eq.s32.totalorder %v85, 1
    %vm90 = vcmp.eq.s32.totalorder %v86, 1
    %vm91 = vcmp.eq.s32.totalorder %v87, 1
    %v92 = vsel %vm88, %v83, 0.0
    %v93 = vsel %vm89, %v82, 0.0
    %v94 = vsel %vm90, %v81, 0.0
    %v95 = vsel %vm91, %v80, 0.0
    %96 = vrot.lane.b32.xlu0 %v12, 15
    %v97 = vpop.permute.xlu0 %96
    %98 = vrot.lane.b32.xlu0 %v16, 15
    %v99 = vpop.permute.xlu0 %98
    %100 = vrot.lane.b32.xlu0 %v14, 15
    %v101 = vpop.permute.xlu0 %100
    %102 = vrot.lane.b32.xlu0 %v19, 15
    %v103 = vpop.permute.xlu0 %102
    %vm104 = vcmp.lt.s32.totalorder %v22, 15
    %v105 = vsel %vm104, %v101, %v103
    %v106 = vsel %vm104, %v99, %v101
    %v107 = vsel %vm104, %v97, %v99
    %v108 = vsel %vm104, %v103, %v97
    %vm109 = vcmp.lt.s32.totalorder %v30, 15
    %vm110 = vcmp.lt.s32.totalorder %v31, 15
    %vm111 = vcmp.lt.s32.totalorder %v32, 15
    %vm112 = vcmp.lt.s32.totalorder %v33, 15
    %vm113 = vmand %vm47, %vm109
    %vm114 = vmand %vm48, %vm110
    %vm115 = vmand %vm49, %vm111
    %vm116 = vmand %vm50, %vm112
    %v117 = vsel %vm113, 1, 0
    %v118 = vsel %vm114, 1, 0
    %v119 = vsel %vm115, 1, 0
    %v120 = vsel %vm116, 1, 0
    %vm121 = vcmp.eq.s32.totalorder %v117, 1
    %vm122 = vcmp.eq.s32.totalorder %v118, 1
    %vm123 = vcmp.eq.s32.totalorder %v119, 1
    %vm124 = vcmp.eq.s32.totalorder %v120, 1
    %v125 = vsel %vm121, %v108, 0.0
    %v126 = vsel %vm122, %v107, 0.0
    %v127 = vsel %vm123, %v106, 0.0
    %v128 = vsel %vm124, %v105, 0.0
    %129 = vrot.lane.b32.xlu0 %v12, 1
    %v130 = vpop.permute.xlu0 %129
    %131 = vrot.lane.b32.xlu0 %v16, 1
    %v132 = vpop.permute.xlu0 %131
    %133 = vrot.lane.b32.xlu0 %v14, 1
    %v134 = vpop.permute.xlu0 %133
    %135 = vrot.lane.b32.xlu0 %v19, 1
    %v136 = vpop.permute.xlu0 %135
    %vm137 = vcmp.lt.s32.totalorder %v22, 1
    %v138 = vsel %vm137, %v134, %v136
    %v139 = vsel %vm137, %v132, %v134
    %v140 = vsel %vm137, %v130, %v132
    %v141 = vsel %vm137, %v136, %v130
    %v142 = vsel %vm51, 1, 0
    %v143 = vsel %vm52, 1, 0
    %v144 = vsel %vm53, 1, 0
    %v145 = vsel %vm54, 1, 0
    %vm146 = vcmp.eq.s32.totalorder %v142, 1
    %vm147 = vcmp.eq.s32.totalorder %v143, 1
    %vm148 = vcmp.eq.s32.totalorder %v144, 1
    %vm149 = vcmp.eq.s32.totalorder %v145, 1
    %v150 = vsel %vm146, %v141, 0.0
    %v151 = vsel %vm147, %v140, 0.0
    %v152 = vsel %vm148, %v139, 0.0
    %v153 = vsel %vm149, %v138, 0.0
    %154 = vrot.lane.b32.xlu0 %v12, 127
    %v155 = vpop.permute.xlu0 %154
    %156 = vrot.lane.b32.xlu0 %v16, 127
    %v157 = vpop.permute.xlu0 %156
    %158 = vrot.lane.b32.xlu0 %v14, 127
    %v159 = vpop.permute.xlu0 %158
    %160 = vrot.lane.b32.xlu0 %v19, 127
    %v161 = vpop.permute.xlu0 %160
    %vm162 = vcmp.lt.s32.totalorder %v22, 127
    %v163 = vsel %vm162, %v159, %v161
    %v164 = vsel %vm162, %v157, %v159
    %v165 = vsel %vm162, %v155, %v157
    %v166 = vsel %vm162, %v161, %v155
    %v167 = vsel %vm109, 1, 0
    %v168 = vsel %vm110, 1, 0
    %v169 = vsel %vm111, 1, 0
    %v170 = vsel %vm112, 1, 0
    %vm171 = vcmp.eq.s32.totalorder %v167, 1
    %vm172 = vcmp.eq.s32.totalorder %v168, 1
    %vm173 = vcmp.eq.s32.totalorder %v169, 1
    %vm174 = vcmp.eq.s32.totalorder %v170, 1
    %v175 = vsel %vm171, %v165, 0.0
    %v176 = vsel %vm172, %v164, 0.0
    %v177 = vsel %vm173, %v163, 0.0
    %v178 = vsel %vm174, %v166, 0.0
    %179 = vrot.lane.b32.xlu0 %v12, 113
    %v180 = vpop.permute.xlu0 %179
    %181 = vrot.lane.b32.xlu0 %v16, 113
    %v182 = vpop.permute.xlu0 %181
    %183 = vrot.lane.b32.xlu0 %v14, 113
    %v184 = vpop.permute.xlu0 %183
    %185 = vrot.lane.b32.xlu0 %v19, 113
    %v186 = vpop.permute.xlu0 %185
    %vm187 = vcmp.lt.s32.totalorder %v22, 113
    %v188 = vsel %vm187, %v184, %v186
    %v189 = vsel %vm187, %v182, %v184
    %v190 = vsel %vm187, %v180, %v182
    %v191 = vsel %vm187, %v186, %v180
    %vm192 = vcmp.lt.s32.totalorder %v26, 240
    %vm193 = vcmp.lt.s32.totalorder %v27, 240
    %vm194 = vcmp.lt.s32.totalorder %v28, 240
    %vm195 = vcmp.lt.s32.totalorder %v29, 240
    %vm196 = vmand %vm192, %vm51
    %vm197 = vmand %vm193, %vm52
    %vm198 = vmand %vm194, %vm53
    %vm199 = vmand %vm195, %vm54
    %v200 = vsel %vm196, 1, 0
    %v201 = vsel %vm197, 1, 0
    %v202 = vsel %vm198, 1, 0
    %v203 = vsel %vm199, 1, 0
    %vm204 = vcmp.eq.s32.totalorder %v200, 1
    %vm205 = vcmp.eq.s32.totalorder %v201, 1
    %vm206 = vcmp.eq.s32.totalorder %v202, 1
    %vm207 = vcmp.eq.s32.totalorder %v203, 1
    %v208 = vsel %vm204, %v190, 0.0
    %v209 = vsel %vm205, %v189, 0.0
    %v210 = vsel %vm206, %v188, 0.0
    %v211 = vsel %vm207, %v191, 0.0
    %212 = vrot.lane.b32.xlu0 %v12, 112
    %v213 = vpop.permute.xlu0 %212
    %214 = vrot.lane.b32.xlu0 %v16, 112
    %v215 = vpop.permute.xlu0 %214
    %216 = vrot.lane.b32.xlu0 %v14, 112
    %v217 = vpop.permute.xlu0 %216
    %218 = vrot.lane.b32.xlu0 %v19, 112
    %v219 = vpop.permute.xlu0 %218
    %vm220 = vcmp.lt.s32.totalorder %v22, 112
    %v221 = vsel %vm220, %v217, %v219
    %v222 = vsel %vm220, %v215, %v217
    %v223 = vsel %vm220, %v213, %v215
    %v224 = vsel %vm220, %v219, %v213
    %v225 = vsel %vm192, 1, 0
    %v226 = vsel %vm193, 1, 0
    %v227 = vsel %vm194, 1, 0
    %v228 = vsel %vm195, 1, 0
    %vm229 = vcmp.eq.s32.totalorder %v225, 1
    %vm230 = vcmp.eq.s32.totalorder %v226, 1
    %vm231 = vcmp.eq.s32.totalorder %v227, 1
    %vm232 = vcmp.eq.s32.totalorder %v228, 1
    %v233 = vsel %vm229, %v223, 0.0
    %v234 = vsel %vm230, %v222, 0.0
    %v235 = vsel %vm231, %v221, 0.0
    %v236 = vsel %vm232, %v224, 0.0
    %237 = vrot.lane.b32.xlu0 %v12, 111
    %v238 = vpop.permute.xlu0 %237
    %239 = vrot.lane.b32.xlu0 %v16, 111
    %v240 = vpop.permute.xlu0 %239
    %241 = vrot.lane.b32.xlu0 %v14, 111
    %v242 = vpop.permute.xlu0 %241
    %243 = vrot.lane.b32.xlu0 %v19, 111
    %v244 = vpop.permute.xlu0 %243
    %vm245 = vcmp.lt.s32.totalorder %v22, 111
    %v246 = vsel %vm245, %v242, %v244
    %v247 = vsel %vm245, %v240, %v242
    %v248 = vsel %vm245, %v238, %v240
    %v249 = vsel %vm245, %v244, %v238
    %vm250 = vmand %vm192, %vm109
    %vm251 = vmand %vm193, %vm110
    %vm252 = vmand %vm194, %vm111
    %vm253 = vmand %vm195, %vm112
    %v254 = vsel %vm250, 1, 0
    %v255 = vsel %vm251, 1, 0
    %v256 = vsel %vm252, 1, 0
    %v257 = vsel %vm253, 1, 0
    %vm258 = vcmp.eq.s32.totalorder %v254, 1
    %vm259 = vcmp.eq.s32.totalorder %v255, 1
    %vm260 = vcmp.eq.s32.totalorder %v256, 1
    %vm261 = vcmp.eq.s32.totalorder %v257, 1
    %v262 = vsel %vm258, %v248, 0.0
    %v263 = vsel %vm259, %v247, 0.0
    %v264 = vsel %vm260, %v246, 0.0
    %v265 = vsel %vm261, %v249, 0.0
    %v270 = vrot.slane %v92, 5
    %v271 = vrot.slane %v93, 5
    %v272 = vrot.slane %v94, 5
    %v273 = vrot.slane %v95, 5
    %v282 = vrot.slane %v125, 2
    %v283 = vrot.slane %v126, 2
    %v284 = vrot.slane %v127, 2
    %v285 = vrot.slane %v128, 2
    %v294 = vrot.slane %v150, 7
    %v295 = vrot.slane %v151, 7
    %v296 = vrot.slane %v152, 7
    %v297 = vrot.slane %v153, 7
    %v302 = vrot.slane %v12, 4
    %v303 = vrot.slane %v16, 4
    %v304 = vrot.slane %v14, 4
    %v305 = vrot.slane %v19, 4
    %v314 = vrot.slane %v175, 1
    %v315 = vrot.slane %v176, 1
    %v316 = vrot.slane %v177, 1
    %v317 = vrot.slane %v178, 1
    %v326 = vrot.slane %v208, 6
    %v327 = vrot.slane %v209, 6
    %v328 = vrot.slane %v210, 6
    %v329 = vrot.slane %v211, 6
    %v338 = vrot.slane %v233, 3
    %v339 = vrot.slane %v234, 3
    %v340 = vrot.slane %v235, 3
    %v341 = vrot.slane %v236, 3
    %vm346 = vcmask 1042432
    %v347 = vsel %vm346, %v67, %v270
    %v348 = vsel %vm346, %v68, %v271
    %v349 = vsel %vm346, %v69, %v272
    %v350 = vsel %vm346, %v70, %v273
    %vm351 = vcmask 1045504
    %v352 = vsel %vm351, %v347, %v282
    %v353 = vsel %vm351, %v348, %v283
    %v354 = vsel %vm351, %v349, %v284
    %v355 = vsel %vm351, %v350, %v285
    %vm356 = vcmask 1040384
    %v357 = vsel %vm356, %v282, %v294
    %v358 = vsel %vm356, %v283, %v295
    %v359 = vsel %vm356, %v284, %v296
    %v360 = vsel %vm356, %v285, %v297
    %vm361 = vcmask 1043456
    %v362 = vsel %vm361, %v357, %v302
    %v363 = vsel %vm361, %v358, %v303
    %v364 = vsel %vm361, %v359, %v304
    %v365 = vsel %vm361, %v360, %v305
    %vm366 = vcmask 1046528
    %v367 = vsel %vm366, %v362, %v314
    %v368 = vsel %vm366, %v363, %v315
    %v369 = vsel %vm366, %v364, %v316
    %v370 = vsel %vm366, %v365, %v317
    %vm371 = vcmask 1041408
    %v372 = vsel %vm371, %v314, %v326
    %v373 = vsel %vm371, %v315, %v327
    %v374 = vsel %vm371, %v316, %v328
    %v375 = vsel %vm371, %v317, %v329
    %vm376 = vcmask 1044480
    %v377 = vsel %vm376, %v372, %v338
    %v378 = vsel %vm376, %v373, %v339
    %v379 = vsel %vm376, %v374, %v340
    %v380 = vsel %vm376, %v375, %v341
    %v381 = vsel %vm346, %v262, 1.0
    %v382 = vsel %vm346, %v263, 1.0
    %v383 = vsel %vm346, %v264, 1.0
    %v384 = vsel %vm346, %v265, 1.0
    %v385 = vld [vmem:[%s1] sm:$0xff]
    %vm386 = vcmask 228352
    %v388 = vsel %vm386, %v385, 0
    %v391 = vsel %vm361, %v381, 0
    %v394 = vsel %vm361, %v382, 0
    %v397 = vsel %vm361, %v383, 0
    %v400 = vsel %vm361, %v384, 0
    %402 = vmatprep.subr.mxu0 0.0
    %403 = vmatpush1.msra.mxu0 0.0
    %404 = vmatprep.subr.mxu0 0.0
    %405 = vmatpush1.msra.mxu0 0.0
    %406 = vmatprep.subr.mxu0 0.0
    %407 = vmatpush1.msra.mxu0 0.0
    %408 = vmatprep.subr.mxu0 0.0
    %409 = vmatpush1.msra.mxu0 0.0
    %410 = vmatprep.subr.mxu0 0.0
    %411 = vmatpush1.msra.mxu0 0.0
    %412 = vmatprep.subr.mxu0 0.0
    %413 = vmatpush1.msra.mxu0 0.0
    %414 = vmatprep.subr.mxu0 0.0
    %415 = vmatpush1.msra.mxu0 0.0
    %416 = vmatprep.subr.mxu0 0.0
    %417 = vmatpush1.msra.mxu0 0.0
    %418 = vmatprep.subr.mxu0 0.0
    %419 = vmatpush1.msra.mxu0 0.0
    %420 = vmatprep.subr.mxu0 0.0
    %421 = vmatpush1.msra.mxu0 0.0
    %422 = vmatprep.subr.mxu0 0.0
    %423 = vmatpush1.msra.mxu0 0.0
    %424 = vmatprep.subr.mxu0 0.0
    %425 = vmatpush1.msra.mxu0 0.0
    %v426 = vand.u32 %v394, 4294901760
    %427 = vmatprep.subr.mxu0 %v426
    %v428 = vand.u32 %v391, 4294901760
    %429 = vmatpush1.msra.mxu0 %v428
    %v430 = vand.u32 %v378, 4294901760
    %431 = vmatprep.subr.mxu0 %v430
    %v432 = vand.u32 %v377, 4294901760
    %433 = vmatpush1.msra.mxu0 %v432
    %v434 = vand.u32 %v368, 4294901760
    %435 = vmatprep.subr.mxu0 %v434
    %v436 = vand.u32 %v367, 4294901760
    %437 = vmatpush1.msra.mxu0 %v436
    %v438 = vand.u32 %v353, 4294901760
    %439 = vmatprep.subr.mxu0 %v438
    %v440 = vand.u32 %v352, 4294901760
    %441 = vmatpush1.msra.mxu0 %v440
    %442 = vmatprep.subr.mxu0 0.0
    %443 = vmatpush2.msra.mxu0 0.0
    %444 = vmatprep.subr.mxu0 0.0
    %445 = vmatpush2.msra.mxu0 0.0
    %446 = vmatprep.subr.mxu0 0.0
    %447 = vmatpush2.msra.mxu0 0.0
    %448 = vmatprep.subr.mxu0 0.0
    %449 = vmatpush2.msra.mxu0 0.0
    %450 = vmatprep.subr.mxu0 0.0
    %451 = vmatpush2.msra.mxu0 0.0
    %452 = vmatprep.subr.mxu0 0.0
    %453 = vmatpush2.msra.mxu0 0.0
    %454 = vmatprep.subr.mxu0 0.0
    %455 = vmatpush2.msra.mxu0 0.0
    %456 = vmatprep.subr.mxu0 0.0
    %457 = vmatpush2.msra.mxu0 0.0
    %458 = vmatprep.subr.mxu0 0.0
    %459 = vmatpush2.msra.mxu0 0.0
    %460 = vmatprep.subr.mxu0 0.0
    %461 = vmatpush2.msra.mxu0 0.0
    %462 = vmatprep.subr.mxu0 0.0
    %463 = vmatpush2.msra.mxu0 0.0
    %464 = vmatprep.subr.mxu0 0.0
    %465 = vmatpush2.msra.mxu0 0.0
    %466 = vmatprep.subr.mxu0 0.0
    %467 = vmatpush2.msra.mxu0 0.0
    %468 = vmatprep.subr.mxu0 0.0
    %469 = vmatpush2.msra.mxu0 0.0
    %470 = vmatprep.subr.mxu0 0.0
    %471 = vmatpush2.msra.mxu0 0.0
    %472 = vmatprep.subr.mxu0 0.0
    %473 = vmatpush2.msra.mxu0 0.0
    %474 = vmatprep.mubr.f32.mxu0 0.0
    %v475 = vand.u32 %v388, 4294901760
    %v476 = vsub.f32 %v388, %v475
    %v477 = vand.u32 %v476, 4294901760
    %v478 = vsub.f32 %v476, %v477
    %v479 = vand.u32 %v478, 4294901760
    %480 = vmatmul.mubr.f32.gmra.mxu0 %v479
    %v481 = vpop.f32.mrf.mxu0
    %v482 = vadd.f32 0.0, %v481
    %v483 = vpop.f32.mrf.mxu0
    %v484 = vadd.f32 0.0, %v483
    %485 = vdwg.mxu0
    %486 = vmatprep.subr.mxu0 0.0
    %487 = vmatpush1.msra.mxu0 0.0
    %488 = vmatprep.subr.mxu0 0.0
    %489 = vmatpush1.msra.mxu0 0.0
    %490 = vmatprep.subr.mxu0 0.0
    %491 = vmatpush1.msra.mxu0 0.0
    %492 = vmatprep.subr.mxu0 0.0
    %493 = vmatpush1.msra.mxu0 0.0
    %494 = vmatprep.subr.mxu0 0.0
    %495 = vmatpush1.msra.mxu0 0.0
    %496 = vmatprep.subr.mxu0 0.0
    %497 = vmatpush1.msra.mxu0 0.0
    %498 = vmatprep.subr.mxu0 0.0
    %499 = vmatpush1.msra.mxu0 0.0
    %500 = vmatprep.subr.mxu0 0.0
    %501 = vmatpush1.msra.mxu0 0.0
    %502 = vmatprep.subr.mxu0 0.0
    %503 = vmatpush1.msra.mxu0 0.0
    %504 = vmatprep.subr.mxu0 0.0
    %505 = vmatpush1.msra.mxu0 0.0
    %506 = vmatprep.subr.mxu0 0.0
    %507 = vmatpush1.msra.mxu0 0.0
    %508 = vmatprep.subr.mxu0 0.0
    %509 = vmatpush1.msra.mxu0 0.0
    %v510 = vand.u32 %v394, 4294901760
    %v511 = vsub.f32 %v394, %v510
    %v512 = vand.u32 %v511, 4294901760
    %v513 = vsub.f32 %v511, %v512
    %v514 = vand.u32 %v513, 4294901760
    %515 = vmatprep.subr.mxu0 %v514
    %v516 = vand.u32 %v391, 4294901760
    %v517 = vsub.f32 %v391, %v516
    %v518 = vand.u32 %v517, 4294901760
    %v519 = vsub.f32 %v517, %v518
    %v520 = vand.u32 %v519, 4294901760
    %521 = vmatpush1.msra.mxu0 %v520
    %v522 = vand.u32 %v378, 4294901760
    %v523 = vsub.f32 %v378, %v522
    %v524 = vand.u32 %v523, 4294901760
    %v525 = vsub.f32 %v523, %v524
    %v526 = vand.u32 %v525, 4294901760
    %527 = vmatprep.subr.mxu0 %v526
    %v528 = vand.u32 %v377, 4294901760
    %v529 = vsub.f32 %v377, %v528
    %v530 = vand.u32 %v529, 4294901760
    %v531 = vsub.f32 %v529, %v530
    %v532 = vand.u32 %v531, 4294901760
    %533 = vmatpush1.msra.mxu0 %v532
    %v534 = vand.u32 %v368, 4294901760
    %v535 = vsub.f32 %v368, %v534
    %v536 = vand.u32 %v535, 4294901760
    %v537 = vsub.f32 %v535, %v536
    %v538 = vand.u32 %v537, 4294901760
    %539 = vmatprep.subr.mxu0 %v538
    %v540 = vand.u32 %v367, 4294901760
    %v541 = vsub.f32 %v367, %v540
    %v542 = vand.u32 %v541, 4294901760
    %v543 = vsub.f32 %v541, %v542
    %v544 = vand.u32 %v543, 4294901760
    %545 = vmatpush1.msra.mxu0 %v544
    %v546 = vand.u32 %v353, 4294901760
    %v547 = vsub.f32 %v353, %v546
    %v548 = vand.u32 %v547, 4294901760
    %v549 = vsub.f32 %v547, %v548
    %v550 = vand.u32 %v549, 4294901760
    %551 = vmatprep.subr.mxu0 %v550
    %v552 = vand.u32 %v352, 4294901760
    %v553 = vsub.f32 %v352, %v552
    %v554 = vand.u32 %v553, 4294901760
    %v555 = vsub.f32 %v553, %v554
    %v556 = vand.u32 %v555, 4294901760
    %557 = vmatpush1.msra.mxu0 %v556
    %558 = vmatprep.subr.mxu0 0.0
    %559 = vmatpush2.msra.mxu0 0.0
    %560 = vmatprep.subr.mxu0 0.0
    %561 = vmatpush2.msra.mxu0 0.0
    %562 = vmatprep.subr.mxu0 0.0
    %563 = vmatpush2.msra.mxu0 0.0
    %564 = vmatprep.subr.mxu0 0.0
    %565 = vmatpush2.msra.mxu0 0.0
    %566 = vmatprep.subr.mxu0 0.0
    %567 = vmatpush2.msra.mxu0 0.0
    %568 = vmatprep.subr.mxu0 0.0
    %569 = vmatpush2.msra.mxu0 0.0
    %570 = vmatprep.subr.mxu0 0.0
    %571 = vmatpush2.msra.mxu0 0.0
    %572 = vmatprep.subr.mxu0 0.0
    %573 = vmatpush2.msra.mxu0 0.0
    %574 = vmatprep.subr.mxu0 0.0
    %575 = vmatpush2.msra.mxu0 0.0
    %576 = vmatprep.subr.mxu0 0.0
    %577 = vmatpush2.msra.mxu0 0.0
    %578 = vmatprep.subr.mxu0 0.0
    %579 = vmatpush2.msra.mxu0 0.0
    %580 = vmatprep.subr.mxu0 0.0
    %581 = vmatpush2.msra.mxu0 0.0
    %582 = vmatprep.subr.mxu0 0.0
    %583 = vmatpush2.msra.mxu0 0.0
    %584 = vmatprep.subr.mxu0 0.0
    %585 = vmatpush2.msra.mxu0 0.0
    %586 = vmatprep.subr.mxu0 0.0
    %587 = vmatpush2.msra.mxu0 0.0
    %588 = vmatprep.subr.mxu0 0.0
    %589 = vmatpush2.msra.mxu0 0.0
    %590 = vmatprep.mubr.f32.mxu0 0.0
    %v591 = vand.u32 %v388, 4294901760
    %592 = vmatmul.mubr.f32.gmra.mxu0 %v591
    %v593 = vpop.f32.mrf.mxu0
    %v594 = vadd.f32 %v482, %v593
    %v595 = vpop.f32.mrf.mxu0
    %v596 = vadd.f32 %v484, %v595
    %597 = vdwg.mxu0
    %598 = vmatprep.subr.mxu0 0.0
    %599 = vmatpush1.msra.mxu0 0.0
    %600 = vmatprep.subr.mxu0 0.0
    %601 = vmatpush1.msra.mxu0 0.0
    %602 = vmatprep.subr.mxu0 0.0
    %603 = vmatpush1.msra.mxu0 0.0
    %604 = vmatprep.subr.mxu0 0.0
    %605 = vmatpush1.msra.mxu0 0.0
    %606 = vmatprep.subr.mxu0 0.0
    %607 = vmatpush1.msra.mxu0 0.0
    %608 = vmatprep.subr.mxu0 0.0
    %609 = vmatpush1.msra.mxu0 0.0
    %610 = vmatprep.subr.mxu0 0.0
    %611 = vmatpush1.msra.mxu0 0.0
    %612 = vmatprep.subr.mxu0 0.0
    %613 = vmatpush1.msra.mxu0 0.0
    %614 = vmatprep.subr.mxu0 0.0
    %615 = vmatpush1.msra.mxu0 0.0
    %616 = vmatprep.subr.mxu0 0.0
    %617 = vmatpush1.msra.mxu0 0.0
    %618 = vmatprep.subr.mxu0 0.0
    %619 = vmatpush1.msra.mxu0 0.0
    %620 = vmatprep.subr.mxu0 0.0
    %621 = vmatpush1.msra.mxu0 0.0
    %v622 = vand.u32 %v394, 4294901760
    %v623 = vsub.f32 %v394, %v622
    %624 = vmatprep.subr.mxu0 %v623
    %v625 = vand.u32 %v391, 4294901760
    %v626 = vsub.f32 %v391, %v625
    %627 = vmatpush1.msra.mxu0 %v626
    %v628 = vand.u32 %v378, 4294901760
    %v629 = vsub.f32 %v378, %v628
    %630 = vmatprep.subr.mxu0 %v629
    %v631 = vand.u32 %v377, 4294901760
    %v632 = vsub.f32 %v377, %v631
    %633 = vmatpush1.msra.mxu0 %v632
    %v634 = vand.u32 %v368, 4294901760
    %v635 = vsub.f32 %v368, %v634
    %636 = vmatprep.subr.mxu0 %v635
    %v637 = vand.u32 %v367, 4294901760
    %v638 = vsub.f32 %v367, %v637
    %639 = vmatpush1.msra.mxu0 %v638
    %v640 = vand.u32 %v353, 4294901760
    %v641 = vsub.f32 %v353, %v640
    %642 = vmatprep.subr.mxu0 %v641
    %v643 = vand.u32 %v352, 4294901760
    %v644 = vsub.f32 %v352, %v643
    %645 = vmatpush1.msra.mxu0 %v644
    %646 = vmatprep.subr.mxu0 0.0
    %647 = vmatpush2.msra.mxu0 0.0
    %648 = vmatprep.subr.mxu0 0.0
    %649 = vmatpush2.msra.mxu0 0.0
    %650 = vmatprep.subr.mxu0 0.0
    %651 = vmatpush2.msra.mxu0 0.0
    %652 = vmatprep.subr.mxu0 0.0
    %653 = vmatpush2.msra.mxu0 0.0
    %654 = vmatprep.subr.mxu0 0.0
    %655 = vmatpush2.msra.mxu0 0.0
    %656 = vmatprep.subr.mxu0 0.0
    %657 = vmatpush2.msra.mxu0 0.0
    %658 = vmatprep.subr.mxu0 0.0
    %659 = vmatpush2.msra.mxu0 0.0
    %660 = vmatprep.subr.mxu0 0.0
    %661 = vmatpush2.msra.mxu0 0.0
    %662 = vmatprep.subr.mxu0 0.0
    %663 = vmatpush2.msra.mxu0 0.0
    %664 = vmatprep.subr.mxu0 0.0
    %665 = vmatpush2.msra.mxu0 0.0
    %666 = vmatprep.subr.mxu0 0.0
    %667 = vmatpush2.msra.mxu0 0.0
    %668 = vmatprep.subr.mxu0 0.0
    %669 = vmatpush2.msra.mxu0 0.0
    %670 = vmatprep.subr.mxu0 0.0
    %671 = vmatpush2.msra.mxu0 0.0
    %672 = vmatprep.subr.mxu0 0.0
    %673 = vmatpush2.msra.mxu0 0.0
    %674 = vmatprep.subr.mxu0 0.0
    %675 = vmatpush2.msra.mxu0 0.0
    %676 = vmatprep.subr.mxu0 0.0
    %677 = vmatpush2.msra.mxu0 0.0
    %678 = vmatprep.mubr.f32.mxu0 0.0
    %v679 = vand.u32 %v388, 4294901760
    %v680 = vsub.f32 %v388, %v679
    %681 = vmatmul.mubr.f32.gmra.mxu0 %v680
    %v682 = vpop.f32.mrf.mxu0
    %v683 = vadd.f32 %v594, %v682
    %v684 = vpop.f32.mrf.mxu0
    %v685 = vadd.f32 %v596, %v684
    %686 = vdwg.mxu0
    %687 = vmatprep.subr.mxu0 0.0
    %688 = vmatpush1.msra.mxu0 0.0
    %689 = vmatprep.subr.mxu0 0.0
    %690 = vmatpush1.msra.mxu0 0.0
    %691 = vmatprep.subr.mxu0 0.0
    %692 = vmatpush1.msra.mxu0 0.0
    %693 = vmatprep.subr.mxu0 0.0
    %694 = vmatpush1.msra.mxu0 0.0
    %695 = vmatprep.subr.mxu0 0.0
    %696 = vmatpush1.msra.mxu0 0.0
    %697 = vmatprep.subr.mxu0 0.0
    %698 = vmatpush1.msra.mxu0 0.0
    %699 = vmatprep.subr.mxu0 0.0
    %700 = vmatpush1.msra.mxu0 0.0
    %701 = vmatprep.subr.mxu0 0.0
    %702 = vmatpush1.msra.mxu0 0.0
    %703 = vmatprep.subr.mxu0 0.0
    %704 = vmatpush1.msra.mxu0 0.0
    %705 = vmatprep.subr.mxu0 0.0
    %706 = vmatpush1.msra.mxu0 0.0
    %707 = vmatprep.subr.mxu0 0.0
    %708 = vmatpush1.msra.mxu0 0.0
    %709 = vmatprep.subr.mxu0 0.0
    %710 = vmatpush1.msra.mxu0 0.0
    %v711 = vand.u32 %v394, 4294901760
    %712 = vmatprep.subr.mxu0 %v711
    %v713 = vand.u32 %v391, 4294901760
    %714 = vmatpush1.msra.mxu0 %v713
    %v715 = vand.u32 %v378, 4294901760
    %716 = vmatprep.subr.mxu0 %v715
    %v717 = vand.u32 %v377, 4294901760
    %718 = vmatpush1.msra.mxu0 %v717
    %v719 = vand.u32 %v368, 4294901760
    %720 = vmatprep.subr.mxu0 %v719
    %v721 = vand.u32 %v367, 4294901760
    %722 = vmatpush1.msra.mxu0 %v721
    %v723 = vand.u32 %v353, 4294901760
    %724 = vmatprep.subr.mxu0 %v723
    %v725 = vand.u32 %v352, 4294901760
    %726 = vmatpush1.msra.mxu0 %v725
    %727 = vmatprep.subr.mxu0 0.0
    %728 = vmatpush2.msra.mxu0 0.0
    %729 = vmatprep.subr.mxu0 0.0
    %730 = vmatpush2.msra.mxu0 0.0
    %731 = vmatprep.subr.mxu0 0.0
    %732 = vmatpush2.msra.mxu0 0.0
    %733 = vmatprep.subr.mxu0 0.0
    %734 = vmatpush2.msra.mxu0 0.0
    %735 = vmatprep.subr.mxu0 0.0
    %736 = vmatpush2.msra.mxu0 0.0
    %737 = vmatprep.subr.mxu0 0.0
    %738 = vmatpush2.msra.mxu0 0.0
    %739 = vmatprep.subr.mxu0 0.0
    %740 = vmatpush2.msra.mxu0 0.0
    %741 = vmatprep.subr.mxu0 0.0
    %742 = vmatpush2.msra.mxu0 0.0
    %743 = vmatprep.subr.mxu0 0.0
    %744 = vmatpush2.msra.mxu0 0.0
    %745 = vmatprep.subr.mxu0 0.0
    %746 = vmatpush2.msra.mxu0 0.0
    %747 = vmatprep.subr.mxu0 0.0
    %748 = vmatpush2.msra.mxu0 0.0
    %749 = vmatprep.subr.mxu0 0.0
    %750 = vmatpush2.msra.mxu0 0.0
    %751 = vmatprep.subr.mxu0 0.0
    %752 = vmatpush2.msra.mxu0 0.0
    %753 = vmatprep.subr.mxu0 0.0
    %754 = vmatpush2.msra.mxu0 0.0
    %755 = vmatprep.subr.mxu0 0.0
    %756 = vmatpush2.msra.mxu0 0.0
    %757 = vmatprep.subr.mxu0 0.0
    %758 = vmatpush2.msra.mxu0 0.0
    %759 = vmatprep.mubr.f32.mxu0 0.0
    %v760 = vand.u32 %v388, 4294901760
    %v761 = vsub.f32 %v388, %v760
    %v762 = vand.u32 %v761, 4294901760
    %763 = vmatmul.mubr.f32.gmra.mxu0 %v762
    %v764 = vpop.f32.mrf.mxu0
    %v765 = vadd.f32 %v683, %v764
    %v766 = vpop.f32.mrf.mxu0
    %v767 = vadd.f32 %v685, %v766
    %768 = vdwg.mxu0
    %769 = vmatprep.subr.mxu0 0.0
    %770 = vmatpush1.msra.mxu0 0.0
    %771 = vmatprep.subr.mxu0 0.0
    %772 = vmatpush1.msra.mxu0 0.0
    %773 = vmatprep.subr.mxu0 0.0
    %774 = vmatpush1.msra.mxu0 0.0
    %775 = vmatprep.subr.mxu0 0.0
    %776 = vmatpush1.msra.mxu0 0.0
    %777 = vmatprep.subr.mxu0 0.0
    %778 = vmatpush1.msra.mxu0 0.0
    %779 = vmatprep.subr.mxu0 0.0
    %780 = vmatpush1.msra.mxu0 0.0
    %781 = vmatprep.subr.mxu0 0.0
    %782 = vmatpush1.msra.mxu0 0.0
    %783 = vmatprep.subr.mxu0 0.0
    %784 = vmatpush1.msra.mxu0 0.0
    %785 = vmatprep.subr.mxu0 0.0
    %786 = vmatpush1.msra.mxu0 0.0
    %787 = vmatprep.subr.mxu0 0.0
    %788 = vmatpush1.msra.mxu0 0.0
    %789 = vmatprep.subr.mxu0 0.0
    %790 = vmatpush1.msra.mxu0 0.0
    %791 = vmatprep.subr.mxu0 0.0
    %792 = vmatpush1.msra.mxu0 0.0
    %v793 = vand.u32 %v394, 4294901760
    %v794 = vsub.f32 %v394, %v793
    %v795 = vand.u32 %v794, 4294901760
    %796 = vmatprep.subr.mxu0 %v795
    %v797 = vand.u32 %v391, 4294901760
    %v798 = vsub.f32 %v391, %v797
    %v799 = vand.u32 %v798, 4294901760
    %800 = vmatpush1.msra.mxu0 %v799
    %v801 = vand.u32 %v378, 4294901760
    %v802 = vsub.f32 %v378, %v801
    %v803 = vand.u32 %v802, 4294901760
    %804 = vmatprep.subr.mxu0 %v803
    %v805 = vand.u32 %v377, 4294901760
    %v806 = vsub.f32 %v377, %v805
    %v807 = vand.u32 %v806, 4294901760
    %808 = vmatpush1.msra.mxu0 %v807
    %v809 = vand.u32 %v368, 4294901760
    %v810 = vsub.f32 %v368, %v809
    %v811 = vand.u32 %v810, 4294901760
    %812 = vmatprep.subr.mxu0 %v811
    %v813 = vand.u32 %v367, 4294901760
    %v814 = vsub.f32 %v367, %v813
    %v815 = vand.u32 %v814, 4294901760
    %816 = vmatpush1.msra.mxu0 %v815
    %v817 = vand.u32 %v353, 4294901760
    %v818 = vsub.f32 %v353, %v817
    %v819 = vand.u32 %v818, 4294901760
    %820 = vmatprep.subr.mxu0 %v819
    %v821 = vand.u32 %v352, 4294901760
    %v822 = vsub.f32 %v352, %v821
    %v823 = vand.u32 %v822, 4294901760
    %824 = vmatpush1.msra.mxu0 %v823
    %825 = vmatprep.subr.mxu0 0.0
    %826 = vmatpush2.msra.mxu0 0.0
    %827 = vmatprep.subr.mxu0 0.0
    %828 = vmatpush2.msra.mxu0 0.0
    %829 = vmatprep.subr.mxu0 0.0
    %830 = vmatpush2.msra.mxu0 0.0
    %831 = vmatprep.subr.mxu0 0.0
    %832 = vmatpush2.msra.mxu0 0.0
    %833 = vmatprep.subr.mxu0 0.0
    %834 = vmatpush2.msra.mxu0 0.0
    %835 = vmatprep.subr.mxu0 0.0
    %836 = vmatpush2.msra.mxu0 0.0
    %837 = vmatprep.subr.mxu0 0.0
    %838 = vmatpush2.msra.mxu0 0.0
    %839 = vmatprep.subr.mxu0 0.0
    %840 = vmatpush2.msra.mxu0 0.0
    %841 = vmatprep.subr.mxu0 0.0
    %842 = vmatpush2.msra.mxu0 0.0
    %843 = vmatprep.subr.mxu0 0.0
    %844 = vmatpush2.msra.mxu0 0.0
    %845 = vmatprep.subr.mxu0 0.0
    %846 = vmatpush2.msra.mxu0 0.0
    %847 = vmatprep.subr.mxu0 0.0
    %848 = vmatpush2.msra.mxu0 0.0
    %849 = vmatprep.subr.mxu0 0.0
    %850 = vmatpush2.msra.mxu0 0.0
    %851 = vmatprep.subr.mxu0 0.0
    %852 = vmatpush2.msra.mxu0 0.0
    %853 = vmatprep.subr.mxu0 0.0
    %854 = vmatpush2.msra.mxu0 0.0
    %855 = vmatprep.subr.mxu0 0.0
    %856 = vmatpush2.msra.mxu0 0.0
    %857 = vmatprep.mubr.f32.mxu0 0.0
    %v858 = vand.u32 %v388, 4294901760
    %859 = vmatmul.mubr.f32.gmra.mxu0 %v858
    %v860 = vpop.f32.mrf.mxu0
    %v861 = vadd.f32 %v765, %v860
    %v862 = vpop.f32.mrf.mxu0
    %v863 = vadd.f32 %v767, %v862
    %864 = vdwg.mxu0
    %865 = vmatprep.subr.mxu0 0.0
    %866 = vmatpush1.msra.mxu0 0.0
    %867 = vmatprep.subr.mxu0 0.0
    %868 = vmatpush1.msra.mxu0 0.0
    %869 = vmatprep.subr.mxu0 0.0
    %870 = vmatpush1.msra.mxu0 0.0
    %871 = vmatprep.subr.mxu0 0.0
    %872 = vmatpush1.msra.mxu0 0.0
    %873 = vmatprep.subr.mxu0 0.0
    %874 = vmatpush1.msra.mxu0 0.0
    %875 = vmatprep.subr.mxu0 0.0
    %876 = vmatpush1.msra.mxu0 0.0
    %877 = vmatprep.subr.mxu0 0.0
    %878 = vmatpush1.msra.mxu0 0.0
    %879 = vmatprep.subr.mxu0 0.0
    %880 = vmatpush1.msra.mxu0 0.0
    %881 = vmatprep.subr.mxu0 0.0
    %882 = vmatpush1.msra.mxu0 0.0
    %883 = vmatprep.subr.mxu0 0.0
    %884 = vmatpush1.msra.mxu0 0.0
    %885 = vmatprep.subr.mxu0 0.0
    %886 = vmatpush1.msra.mxu0 0.0
    %887 = vmatprep.subr.mxu0 0.0
    %888 = vmatpush1.msra.mxu0 0.0
    %v889 = vand.u32 %v394, 4294901760
    %890 = vmatprep.subr.mxu0 %v889
    %v891 = vand.u32 %v391, 4294901760
    %892 = vmatpush1.msra.mxu0 %v891
    %v893 = vand.u32 %v378, 4294901760
    %894 = vmatprep.subr.mxu0 %v893
    %v895 = vand.u32 %v377, 4294901760
    %896 = vmatpush1.msra.mxu0 %v895
    %v897 = vand.u32 %v368, 4294901760
    %898 = vmatprep.subr.mxu0 %v897
    %v899 = vand.u32 %v367, 4294901760
    %900 = vmatpush1.msra.mxu0 %v899
    %v901 = vand.u32 %v353, 4294901760
    %902 = vmatprep.subr.mxu0 %v901
    %v903 = vand.u32 %v352, 4294901760
    %904 = vmatpush1.msra.mxu0 %v903
    %905 = vmatprep.subr.mxu0 0.0
    %906 = vmatpush2.msra.mxu0 0.0
    %907 = vmatprep.subr.mxu0 0.0
    %908 = vmatpush2.msra.mxu0 0.0
    %909 = vmatprep.subr.mxu0 0.0
    %910 = vmatpush2.msra.mxu0 0.0
    %911 = vmatprep.subr.mxu0 0.0
    %912 = vmatpush2.msra.mxu0 0.0
    %913 = vmatprep.subr.mxu0 0.0
    %914 = vmatpush2.msra.mxu0 0.0
    %915 = vmatprep.subr.mxu0 0.0
    %916 = vmatpush2.msra.mxu0 0.0
    %917 = vmatprep.subr.mxu0 0.0
    %918 = vmatpush2.msra.mxu0 0.0
    %919 = vmatprep.subr.mxu0 0.0
    %920 = vmatpush2.msra.mxu0 0.0
    %921 = vmatprep.subr.mxu0 0.0
    %922 = vmatpush2.msra.mxu0 0.0
    %923 = vmatprep.subr.mxu0 0.0
    %924 = vmatpush2.msra.mxu0 0.0
    %925 = vmatprep.subr.mxu0 0.0
    %926 = vmatpush2.msra.mxu0 0.0
    %927 = vmatprep.subr.mxu0 0.0
    %928 = vmatpush2.msra.mxu0 0.0
    %929 = vmatprep.subr.mxu0 0.0
    %930 = vmatpush2.msra.mxu0 0.0
    %931 = vmatprep.subr.mxu0 0.0
    %932 = vmatpush2.msra.mxu0 0.0
    %933 = vmatprep.subr.mxu0 0.0
    %934 = vmatpush2.msra.mxu0 0.0
    %935 = vmatprep.subr.mxu0 0.0
    %936 = vmatpush2.msra.mxu0 0.0
    %937 = vmatprep.mubr.f32.mxu0 0.0
    %v938 = vand.u32 %v388, 4294901760
    %939 = vmatmul.mubr.f32.gmra.mxu0 %v938
    %v940 = vpop.f32.mrf.mxu0
    %v941 = vadd.f32 %v861, %v940
    %v942 = vpop.f32.mrf.mxu0
    %v943 = vadd.f32 %v863, %v942
    %944 = vdwg.mxu0
    %945 = vmatprep.subr.mxu0 0.0
    %946 = vmatpush1.msra.mxu0 0.0
    %947 = vmatprep.subr.mxu0 0.0
    %948 = vmatpush1.msra.mxu0 0.0
    %949 = vmatprep.subr.mxu0 0.0
    %950 = vmatpush1.msra.mxu0 0.0
    %951 = vmatprep.subr.mxu0 0.0
    %952 = vmatpush1.msra.mxu0 0.0
    %953 = vmatprep.subr.mxu0 0.0
    %954 = vmatpush1.msra.mxu0 0.0
    %955 = vmatprep.subr.mxu0 0.0
    %956 = vmatpush1.msra.mxu0 0.0
    %957 = vmatprep.subr.mxu0 0.0
    %958 = vmatpush1.msra.mxu0 0.0
    %959 = vmatprep.subr.mxu0 0.0
    %960 = vmatpush1.msra.mxu0 0.0
    %961 = vmatprep.subr.mxu0 0.0
    %962 = vmatpush1.msra.mxu0 0.0
    %963 = vmatprep.subr.mxu0 0.0
    %964 = vmatpush1.msra.mxu0 0.0
    %965 = vmatprep.subr.mxu0 0.0
    %966 = vmatpush1.msra.mxu0 0.0
    %967 = vmatprep.subr.mxu0 0.0
    %968 = vmatpush1.msra.mxu0 0.0
    %v969 = vand.u32 %v400, 4294901760
    %970 = vmatprep.subr.mxu0 %v969
    %v971 = vand.u32 %v397, 4294901760
    %972 = vmatpush1.msra.mxu0 %v971
    %v973 = vand.u32 %v380, 4294901760
    %974 = vmatprep.subr.mxu0 %v973
    %v975 = vand.u32 %v379, 4294901760
    %976 = vmatpush1.msra.mxu0 %v975
    %v977 = vand.u32 %v370, 4294901760
    %978 = vmatprep.subr.mxu0 %v977
    %v979 = vand.u32 %v369, 4294901760
    %980 = vmatpush1.msra.mxu0 %v979
    %v981 = vand.u32 %v355, 4294901760
    %982 = vmatprep.subr.mxu0 %v981
    %v983 = vand.u32 %v354, 4294901760
    %984 = vmatpush1.msra.mxu0 %v983
    %985 = vmatprep.subr.mxu0 0.0
    %986 = vmatpush2.msra.mxu0 0.0
    %987 = vmatprep.subr.mxu0 0.0
    %988 = vmatpush2.msra.mxu0 0.0
    %989 = vmatprep.subr.mxu0 0.0
    %990 = vmatpush2.msra.mxu0 0.0
    %991 = vmatprep.subr.mxu0 0.0
    %992 = vmatpush2.msra.mxu0 0.0
    %993 = vmatprep.subr.mxu0 0.0
    %994 = vmatpush2.msra.mxu0 0.0
    %995 = vmatprep.subr.mxu0 0.0
    %996 = vmatpush2.msra.mxu0 0.0
    %997 = vmatprep.subr.mxu0 0.0
    %998 = vmatpush2.msra.mxu0 0.0
    %999 = vmatprep.subr.mxu0 0.0
    %1000 = vmatpush2.msra.mxu0 0.0
    %1001 = vmatprep.subr.mxu0 0.0
    %1002 = vmatpush2.msra.mxu0 0.0
    %1003 = vmatprep.subr.mxu0 0.0
    %1004 = vmatpush2.msra.mxu0 0.0
    %1005 = vmatprep.subr.mxu0 0.0
    %1006 = vmatpush2.msra.mxu0 0.0
    %1007 = vmatprep.subr.mxu0 0.0
    %1008 = vmatpush2.msra.mxu0 0.0
    %1009 = vmatprep.subr.mxu0 0.0
    %1010 = vmatpush2.msra.mxu0 0.0
    %1011 = vmatprep.subr.mxu0 0.0
    %1012 = vmatpush2.msra.mxu0 0.0
    %1013 = vmatprep.subr.mxu0 0.0
    %1014 = vmatpush2.msra.mxu0 0.0
    %1015 = vmatprep.subr.mxu0 0.0
    %1016 = vmatpush2.msra.mxu0 0.0
    %1017 = vmatprep.mubr.f32.mxu0 0.0
    %v1018 = vand.u32 %v388, 4294901760
    %v1019 = vsub.f32 %v388, %v1018
    %v1020 = vand.u32 %v1019, 4294901760
    %v1021 = vsub.f32 %v1019, %v1020
    %v1022 = vand.u32 %v1021, 4294901760
    %1023 = vmatmul.mubr.f32.gmra.mxu0 %v1022
    %v1024 = vpop.f32.mrf.mxu0
    %v1025 = vadd.f32 0.0, %v1024
    %v1026 = vpop.f32.mrf.mxu0
    %v1027 = vadd.f32 0.0, %v1026
    %1028 = vdwg.mxu0
    %1029 = vmatprep.subr.mxu0 0.0
    %1030 = vmatpush1.msra.mxu0 0.0
    %1031 = vmatprep.subr.mxu0 0.0
    %1032 = vmatpush1.msra.mxu0 0.0
    %1033 = vmatprep.subr.mxu0 0.0
    %1034 = vmatpush1.msra.mxu0 0.0
    %1035 = vmatprep.subr.mxu0 0.0
    %1036 = vmatpush1.msra.mxu0 0.0
    %1037 = vmatprep.subr.mxu0 0.0
    %1038 = vmatpush1.msra.mxu0 0.0
    %1039 = vmatprep.subr.mxu0 0.0
    %1040 = vmatpush1.msra.mxu0 0.0
    %1041 = vmatprep.subr.mxu0 0.0
    %1042 = vmatpush1.msra.mxu0 0.0
    %1043 = vmatprep.subr.mxu0 0.0
    %1044 = vmatpush1.msra.mxu0 0.0
    %1045 = vmatprep.subr.mxu0 0.0
    %1046 = vmatpush1.msra.mxu0 0.0
    %1047 = vmatprep.subr.mxu0 0.0
    %1048 = vmatpush1.msra.mxu0 0.0
    %1049 = vmatprep.subr.mxu0 0.0
    %1050 = vmatpush1.msra.mxu0 0.0
    %1051 = vmatprep.subr.mxu0 0.0
    %1052 = vmatpush1.msra.mxu0 0.0
    %v1053 = vand.u32 %v400, 4294901760
    %v1054 = vsub.f32 %v400, %v1053
    %v1055 = vand.u32 %v1054, 4294901760
    %v1056 = vsub.f32 %v1054, %v1055
    %v1057 = vand.u32 %v1056, 4294901760
    %1058 = vmatprep.subr.mxu0 %v1057
    %v1059 = vand.u32 %v397, 4294901760
    %v1060 = vsub.f32 %v397, %v1059
    %v1061 = vand.u32 %v1060, 4294901760
    %v1062 = vsub.f32 %v1060, %v1061
    %v1063 = vand.u32 %v1062, 4294901760
    %1064 = vmatpush1.msra.mxu0 %v1063
    %v1065 = vand.u32 %v380, 4294901760
    %v1066 = vsub.f32 %v380, %v1065
    %v1067 = vand.u32 %v1066, 4294901760
    %v1068 = vsub.f32 %v1066, %v1067
    %v1069 = vand.u32 %v1068, 4294901760
    %1070 = vmatprep.subr.mxu0 %v1069
    %v1071 = vand.u32 %v379, 4294901760
    %v1072 = vsub.f32 %v379, %v1071
    %v1073 = vand.u32 %v1072, 4294901760
    %v1074 = vsub.f32 %v1072, %v1073
    %v1075 = vand.u32 %v1074, 4294901760
    %1076 = vmatpush1.msra.mxu0 %v1075
    %v1077 = vand.u32 %v370, 4294901760
    %v1078 = vsub.f32 %v370, %v1077
    %v1079 = vand.u32 %v1078, 4294901760
    %v1080 = vsub.f32 %v1078, %v1079
    %v1081 = vand.u32 %v1080, 4294901760
    %1082 = vmatprep.subr.mxu0 %v1081
    %v1083 = vand.u32 %v369, 4294901760
    %v1084 = vsub.f32 %v369, %v1083
    %v1085 = vand.u32 %v1084, 4294901760
    %v1086 = vsub.f32 %v1084, %v1085
    %v1087 = vand.u32 %v1086, 4294901760
    %1088 = vmatpush1.msra.mxu0 %v1087
    %v1089 = vand.u32 %v355, 4294901760
    %v1090 = vsub.f32 %v355, %v1089
    %v1091 = vand.u32 %v1090, 4294901760
    %v1092 = vsub.f32 %v1090, %v1091
    %v1093 = vand.u32 %v1092, 4294901760
    %1094 = vmatprep.subr.mxu0 %v1093
    %v1095 = vand.u32 %v354, 4294901760
    %v1096 = vsub.f32 %v354, %v1095
    %v1097 = vand.u32 %v1096, 4294901760
    %v1098 = vsub.f32 %v1096, %v1097
    %v1099 = vand.u32 %v1098, 4294901760
    %1100 = vmatpush1.msra.mxu0 %v1099
    %1101 = vmatprep.subr.mxu0 0.0
    %1102 = vmatpush2.msra.mxu0 0.0
    %1103 = vmatprep.subr.mxu0 0.0
    %1104 = vmatpush2.msra.mxu0 0.0
    %1105 = vmatprep.subr.mxu0 0.0
    %1106 = vmatpush2.msra.mxu0 0.0
    %1107 = vmatprep.subr.mxu0 0.0
    %1108 = vmatpush2.msra.mxu0 0.0
    %1109 = vmatprep.subr.mxu0 0.0
    %1110 = vmatpush2.msra.mxu0 0.0
    %1111 = vmatprep.subr.mxu0 0.0
    %1112 = vmatpush2.msra.mxu0 0.0
    %1113 = vmatprep.subr.mxu0 0.0
    %1114 = vmatpush2.msra.mxu0 0.0
    %1115 = vmatprep.subr.mxu0 0.0
    %1116 = vmatpush2.msra.mxu0 0.0
    %1117 = vmatprep.subr.mxu0 0.0
    %1118 = vmatpush2.msra.mxu0 0.0
    %1119 = vmatprep.subr.mxu0 0.0
    %1120 = vmatpush2.msra.mxu0 0.0
    %1121 = vmatprep.subr.mxu0 0.0
    %1122 = vmatpush2.msra.mxu0 0.0
    %1123 = vmatprep.subr.mxu0 0.0
    %1124 = vmatpush2.msra.mxu0 0.0
    %1125 = vmatprep.subr.mxu0 0.0
    %1126 = vmatpush2.msra.mxu0 0.0
    %1127 = vmatprep.subr.mxu0 0.0
    %1128 = vmatpush2.msra.mxu0 0.0
    %1129 = vmatprep.subr.mxu0 0.0
    %1130 = vmatpush2.msra.mxu0 0.0
    %1131 = vmatprep.subr.mxu0 0.0
    %1132 = vmatpush2.msra.mxu0 0.0
    %1133 = vmatprep.mubr.f32.mxu0 0.0
    %v1134 = vand.u32 %v388, 4294901760
    %1135 = vmatmul.mubr.f32.gmra.mxu0 %v1134
    %v1136 = vpop.f32.mrf.mxu0
    %v1137 = vadd.f32 %v1025, %v1136
    %v1138 = vpop.f32.mrf.mxu0
    %v1139 = vadd.f32 %v1027, %v1138
    %1140 = vdwg.mxu0
    %1141 = vmatprep.subr.mxu0 0.0
    %1142 = vmatpush1.msra.mxu0 0.0
    %1143 = vmatprep.subr.mxu0 0.0
    %1144 = vmatpush1.msra.mxu0 0.0
    %1145 = vmatprep.subr.mxu0 0.0
    %1146 = vmatpush1.msra.mxu0 0.0
    %1147 = vmatprep.subr.mxu0 0.0
    %1148 = vmatpush1.msra.mxu0 0.0
    %1149 = vmatprep.subr.mxu0 0.0
    %1150 = vmatpush1.msra.mxu0 0.0
    %1151 = vmatprep.subr.mxu0 0.0
    %1152 = vmatpush1.msra.mxu0 0.0
    %1153 = vmatprep.subr.mxu0 0.0
    %1154 = vmatpush1.msra.mxu0 0.0
    %1155 = vmatprep.subr.mxu0 0.0
    %1156 = vmatpush1.msra.mxu0 0.0
    %1157 = vmatprep.subr.mxu0 0.0
    %1158 = vmatpush1.msra.mxu0 0.0
    %1159 = vmatprep.subr.mxu0 0.0
    %1160 = vmatpush1.msra.mxu0 0.0
    %1161 = vmatprep.subr.mxu0 0.0
    %1162 = vmatpush1.msra.mxu0 0.0
    %1163 = vmatprep.subr.mxu0 0.0
    %1164 = vmatpush1.msra.mxu0 0.0
    %v1165 = vand.u32 %v400, 4294901760
    %v1166 = vsub.f32 %v400, %v1165
    %1167 = vmatprep.subr.mxu0 %v1166
    %v1168 = vand.u32 %v397, 4294901760
    %v1169 = vsub.f32 %v397, %v1168
    %1170 = vmatpush1.msra.mxu0 %v1169
    %v1171 = vand.u32 %v380, 4294901760
    %v1172 = vsub.f32 %v380, %v1171
    %1173 = vmatprep.subr.mxu0 %v1172
    %v1174 = vand.u32 %v379, 4294901760
    %v1175 = vsub.f32 %v379, %v1174
    %1176 = vmatpush1.msra.mxu0 %v1175
    %v1177 = vand.u32 %v370, 4294901760
    %v1178 = vsub.f32 %v370, %v1177
    %1179 = vmatprep.subr.mxu0 %v1178
    %v1180 = vand.u32 %v369, 4294901760
    %v1181 = vsub.f32 %v369, %v1180
    %1182 = vmatpush1.msra.mxu0 %v1181
    %v1183 = vand.u32 %v355, 4294901760
    %v1184 = vsub.f32 %v355, %v1183
    %1185 = vmatprep.subr.mxu0 %v1184
    %v1186 = vand.u32 %v354, 4294901760
    %v1187 = vsub.f32 %v354, %v1186
    %1188 = vmatpush1.msra.mxu0 %v1187
    %1189 = vmatprep.subr.mxu0 0.0
    %1190 = vmatpush2.msra.mxu0 0.0
    %1191 = vmatprep.subr.mxu0 0.0
    %1192 = vmatpush2.msra.mxu0 0.0
    %1193 = vmatprep.subr.mxu0 0.0
    %1194 = vmatpush2.msra.mxu0 0.0
    %1195 = vmatprep.subr.mxu0 0.0
    %1196 = vmatpush2.msra.mxu0 0.0
    %1197 = vmatprep.subr.mxu0 0.0
    %1198 = vmatpush2.msra.mxu0 0.0
    %1199 = vmatprep.subr.mxu0 0.0
    %1200 = vmatpush2.msra.mxu0 0.0
    %1201 = vmatprep.subr.mxu0 0.0
    %1202 = vmatpush2.msra.mxu0 0.0
    %1203 = vmatprep.subr.mxu0 0.0
    %1204 = vmatpush2.msra.mxu0 0.0
    %1205 = vmatprep.subr.mxu0 0.0
    %1206 = vmatpush2.msra.mxu0 0.0
    %1207 = vmatprep.subr.mxu0 0.0
    %1208 = vmatpush2.msra.mxu0 0.0
    %1209 = vmatprep.subr.mxu0 0.0
    %1210 = vmatpush2.msra.mxu0 0.0
    %1211 = vmatprep.subr.mxu0 0.0
    %1212 = vmatpush2.msra.mxu0 0.0
    %1213 = vmatprep.subr.mxu0 0.0
    %1214 = vmatpush2.msra.mxu0 0.0
    %1215 = vmatprep.subr.mxu0 0.0
    %1216 = vmatpush2.msra.mxu0 0.0
    %1217 = vmatprep.subr.mxu0 0.0
    %1218 = vmatpush2.msra.mxu0 0.0
    %1219 = vmatprep.subr.mxu0 0.0
    %1220 = vmatpush2.msra.mxu0 0.0
    %1221 = vmatprep.mubr.f32.mxu0 0.0
    %v1222 = vand.u32 %v388, 4294901760
    %v1223 = vsub.f32 %v388, %v1222
    %1224 = vmatmul.mubr.f32.gmra.mxu0 %v1223
    %v1225 = vpop.f32.mrf.mxu0
    %v1226 = vadd.f32 %v1137, %v1225
    %v1227 = vpop.f32.mrf.mxu0
    %v1228 = vadd.f32 %v1139, %v1227
    %1229 = vdwg.mxu0
    %1230 = vmatprep.subr.mxu0 0.0
    %1231 = vmatpush1.msra.mxu0 0.0
    %1232 = vmatprep.subr.mxu0 0.0
    %1233 = vmatpush1.msra.mxu0 0.0
    %1234 = vmatprep.subr.mxu0 0.0
    %1235 = vmatpush1.msra.mxu0 0.0
    %1236 = vmatprep.subr.mxu0 0.0
    %1237 = vmatpush1.msra.mxu0 0.0
    %1238 = vmatprep.subr.mxu0 0.0
    %1239 = vmatpush1.msra.mxu0 0.0
    %1240 = vmatprep.subr.mxu0 0.0
    %1241 = vmatpush1.msra.mxu0 0.0
    %1242 = vmatprep.subr.mxu0 0.0
    %1243 = vmatpush1.msra.mxu0 0.0
    %1244 = vmatprep.subr.mxu0 0.0
    %1245 = vmatpush1.msra.mxu0 0.0
    %1246 = vmatprep.subr.mxu0 0.0
    %1247 = vmatpush1.msra.mxu0 0.0
    %1248 = vmatprep.subr.mxu0 0.0
    %1249 = vmatpush1.msra.mxu0 0.0
    %1250 = vmatprep.subr.mxu0 0.0
    %1251 = vmatpush1.msra.mxu0 0.0
    %1252 = vmatprep.subr.mxu0 0.0
    %1253 = vmatpush1.msra.mxu0 0.0
    %v1254 = vand.u32 %v400, 4294901760
    %1255 = vmatprep.subr.mxu0 %v1254
    %v1256 = vand.u32 %v397, 4294901760
    %1257 = vmatpush1.msra.mxu0 %v1256
    %v1258 = vand.u32 %v380, 4294901760
    %1259 = vmatprep.subr.mxu0 %v1258
    %v1260 = vand.u32 %v379, 4294901760
    %1261 = vmatpush1.msra.mxu0 %v1260
    %v1262 = vand.u32 %v370, 4294901760
    %1263 = vmatprep.subr.mxu0 %v1262
    %v1264 = vand.u32 %v369, 4294901760
    %1265 = vmatpush1.msra.mxu0 %v1264
    %v1266 = vand.u32 %v355, 4294901760
    %1267 = vmatprep.subr.mxu0 %v1266
    %v1268 = vand.u32 %v354, 4294901760
    %1269 = vmatpush1.msra.mxu0 %v1268
    %1270 = vmatprep.subr.mxu0 0.0
    %1271 = vmatpush2.msra.mxu0 0.0
    %1272 = vmatprep.subr.mxu0 0.0
    %1273 = vmatpush2.msra.mxu0 0.0
    %1274 = vmatprep.subr.mxu0 0.0
    %1275 = vmatpush2.msra.mxu0 0.0
    %1276 = vmatprep.subr.mxu0 0.0
    %1277 = vmatpush2.msra.mxu0 0.0
    %1278 = vmatprep.subr.mxu0 0.0
    %1279 = vmatpush2.msra.mxu0 0.0
    %1280 = vmatprep.subr.mxu0 0.0
    %1281 = vmatpush2.msra.mxu0 0.0
    %1282 = vmatprep.subr.mxu0 0.0
    %1283 = vmatpush2.msra.mxu0 0.0
    %1284 = vmatprep.subr.mxu0 0.0
    %1285 = vmatpush2.msra.mxu0 0.0
    %1286 = vmatprep.subr.mxu0 0.0
    %1287 = vmatpush2.msra.mxu0 0.0
    %1288 = vmatprep.subr.mxu0 0.0
    %1289 = vmatpush2.msra.mxu0 0.0
    %1290 = vmatprep.subr.mxu0 0.0
    %1291 = vmatpush2.msra.mxu0 0.0
    %1292 = vmatprep.subr.mxu0 0.0
    %1293 = vmatpush2.msra.mxu0 0.0
    %1294 = vmatprep.subr.mxu0 0.0
    %1295 = vmatpush2.msra.mxu0 0.0
    %1296 = vmatprep.subr.mxu0 0.0
    %1297 = vmatpush2.msra.mxu0 0.0
    %1298 = vmatprep.subr.mxu0 0.0
    %1299 = vmatpush2.msra.mxu0 0.0
    %1300 = vmatprep.subr.mxu0 0.0
    %1301 = vmatpush2.msra.mxu0 0.0
    %1302 = vmatprep.mubr.f32.mxu0 0.0
    %v1303 = vand.u32 %v388, 4294901760
    %v1304 = vsub.f32 %v388, %v1303
    %v1305 = vand.u32 %v1304, 4294901760
    %1306 = vmatmul.mubr.f32.gmra.mxu0 %v1305
    %v1307 = vpop.f32.mrf.mxu0
    %v1308 = vadd.f32 %v1226, %v1307
    %v1309 = vpop.f32.mrf.mxu0
    %v1310 = vadd.f32 %v1228, %v1309
    %1311 = vdwg.mxu0
    %1312 = vmatprep.subr.mxu0 0.0
    %1313 = vmatpush1.msra.mxu0 0.0
    %1314 = vmatprep.subr.mxu0 0.0
    %1315 = vmatpush1.msra.mxu0 0.0
    %1316 = vmatprep.subr.mxu0 0.0
    %1317 = vmatpush1.msra.mxu0 0.0
    %1318 = vmatprep.subr.mxu0 0.0
    %1319 = vmatpush1.msra.mxu0 0.0
    %1320 = vmatprep.subr.mxu0 0.0
    %1321 = vmatpush1.msra.mxu0 0.0
    %1322 = vmatprep.subr.mxu0 0.0
    %1323 = vmatpush1.msra.mxu0 0.0
    %1324 = vmatprep.subr.mxu0 0.0
    %1325 = vmatpush1.msra.mxu0 0.0
    %1326 = vmatprep.subr.mxu0 0.0
    %1327 = vmatpush1.msra.mxu0 0.0
    %1328 = vmatprep.subr.mxu0 0.0
    %1329 = vmatpush1.msra.mxu0 0.0
    %1330 = vmatprep.subr.mxu0 0.0
    %1331 = vmatpush1.msra.mxu0 0.0
    %1332 = vmatprep.subr.mxu0 0.0
    %1333 = vmatpush1.msra.mxu0 0.0
    %1334 = vmatprep.subr.mxu0 0.0
    %1335 = vmatpush1.msra.mxu0 0.0
    %v1336 = vand.u32 %v400, 4294901760
    %v1337 = vsub.f32 %v400, %v1336
    %v1338 = vand.u32 %v1337, 4294901760
    %1339 = vmatprep.subr.mxu0 %v1338
    %v1340 = vand.u32 %v397, 4294901760
    %v1341 = vsub.f32 %v397, %v1340
    %v1342 = vand.u32 %v1341, 4294901760
    %1343 = vmatpush1.msra.mxu0 %v1342
    %v1344 = vand.u32 %v380, 4294901760
    %v1345 = vsub.f32 %v380, %v1344
    %v1346 = vand.u32 %v1345, 4294901760
    %1347 = vmatprep.subr.mxu0 %v1346
    %v1348 = vand.u32 %v379, 4294901760
    %v1349 = vsub.f32 %v379, %v1348
    %v1350 = vand.u32 %v1349, 4294901760
    %1351 = vmatpush1.msra.mxu0 %v1350
    %v1352 = vand.u32 %v370, 4294901760
    %v1353 = vsub.f32 %v370, %v1352
    %v1354 = vand.u32 %v1353, 4294901760
    %1355 = vmatprep.subr.mxu0 %v1354
    %v1356 = vand.u32 %v369, 4294901760
    %v1357 = vsub.f32 %v369, %v1356
    %v1358 = vand.u32 %v1357, 4294901760
    %1359 = vmatpush1.msra.mxu0 %v1358
    %v1360 = vand.u32 %v355, 4294901760
    %v1361 = vsub.f32 %v355, %v1360
    %v1362 = vand.u32 %v1361, 4294901760
    %1363 = vmatprep.subr.mxu0 %v1362
    %v1364 = vand.u32 %v354, 4294901760
    %v1365 = vsub.f32 %v354, %v1364
    %v1366 = vand.u32 %v1365, 4294901760
    %1367 = vmatpush1.msra.mxu0 %v1366
    %1368 = vmatprep.subr.mxu0 0.0
    %1369 = vmatpush2.msra.mxu0 0.0
    %1370 = vmatprep.subr.mxu0 0.0
    %1371 = vmatpush2.msra.mxu0 0.0
    %1372 = vmatprep.subr.mxu0 0.0
    %1373 = vmatpush2.msra.mxu0 0.0
    %1374 = vmatprep.subr.mxu0 0.0
    %1375 = vmatpush2.msra.mxu0 0.0
    %1376 = vmatprep.subr.mxu0 0.0
    %1377 = vmatpush2.msra.mxu0 0.0
    %1378 = vmatprep.subr.mxu0 0.0
    %1379 = vmatpush2.msra.mxu0 0.0
    %1380 = vmatprep.subr.mxu0 0.0
    %1381 = vmatpush2.msra.mxu0 0.0
    %1382 = vmatprep.subr.mxu0 0.0
    %1383 = vmatpush2.msra.mxu0 0.0
    %1384 = vmatprep.subr.mxu0 0.0
    %1385 = vmatpush2.msra.mxu0 0.0
    %1386 = vmatprep.subr.mxu0 0.0
    %1387 = vmatpush2.msra.mxu0 0.0
    %1388 = vmatprep.subr.mxu0 0.0
    %1389 = vmatpush2.msra.mxu0 0.0
    %1390 = vmatprep.subr.mxu0 0.0
    %1391 = vmatpush2.msra.mxu0 0.0
    %1392 = vmatprep.subr.mxu0 0.0
    %1393 = vmatpush2.msra.mxu0 0.0
    %1394 = vmatprep.subr.mxu0 0.0
    %1395 = vmatpush2.msra.mxu0 0.0
    %1396 = vmatprep.subr.mxu0 0.0
    %1397 = vmatpush2.msra.mxu0 0.0
    %1398 = vmatprep.subr.mxu0 0.0
    %1399 = vmatpush2.msra.mxu0 0.0
    %1400 = vmatprep.mubr.f32.mxu0 0.0
    %v1401 = vand.u32 %v388, 4294901760
    %1402 = vmatmul.mubr.f32.gmra.mxu0 %v1401
    %v1403 = vpop.f32.mrf.mxu0
    %v1404 = vadd.f32 %v1308, %v1403
    %v1405 = vpop.f32.mrf.mxu0
    %v1406 = vadd.f32 %v1310, %v1405
    %1407 = vdwg.mxu0
    %1408 = vmatprep.subr.mxu0 0.0
    %1409 = vmatpush1.msra.mxu0 0.0
    %1410 = vmatprep.subr.mxu0 0.0
    %1411 = vmatpush1.msra.mxu0 0.0
    %1412 = vmatprep.subr.mxu0 0.0
    %1413 = vmatpush1.msra.mxu0 0.0
    %1414 = vmatprep.subr.mxu0 0.0
    %1415 = vmatpush1.msra.mxu0 0.0
    %1416 = vmatprep.subr.mxu0 0.0
    %1417 = vmatpush1.msra.mxu0 0.0
    %1418 = vmatprep.subr.mxu0 0.0
    %1419 = vmatpush1.msra.mxu0 0.0
    %1420 = vmatprep.subr.mxu0 0.0
    %1421 = vmatpush1.msra.mxu0 0.0
    %1422 = vmatprep.subr.mxu0 0.0
    %1423 = vmatpush1.msra.mxu0 0.0
    %1424 = vmatprep.subr.mxu0 0.0
    %1425 = vmatpush1.msra.mxu0 0.0
    %1426 = vmatprep.subr.mxu0 0.0
    %1427 = vmatpush1.msra.mxu0 0.0
    %1428 = vmatprep.subr.mxu0 0.0
    %1429 = vmatpush1.msra.mxu0 0.0
    %1430 = vmatprep.subr.mxu0 0.0
    %1431 = vmatpush1.msra.mxu0 0.0
    %v1432 = vand.u32 %v400, 4294901760
    %1433 = vmatprep.subr.mxu0 %v1432
    %v1434 = vand.u32 %v397, 4294901760
    %1435 = vmatpush1.msra.mxu0 %v1434
    %v1436 = vand.u32 %v380, 4294901760
    %1437 = vmatprep.subr.mxu0 %v1436
    %v1438 = vand.u32 %v379, 4294901760
    %1439 = vmatpush1.msra.mxu0 %v1438
    %v1440 = vand.u32 %v370, 4294901760
    %1441 = vmatprep.subr.mxu0 %v1440
    %v1442 = vand.u32 %v369, 4294901760
    %1443 = vmatpush1.msra.mxu0 %v1442
    %v1444 = vand.u32 %v355, 4294901760
    %1445 = vmatprep.subr.mxu0 %v1444
    %v1446 = vand.u32 %v354, 4294901760
    %1447 = vmatpush1.msra.mxu0 %v1446
    %1448 = vmatprep.subr.mxu0 0.0
    %1449 = vmatpush2.msra.mxu0 0.0
    %1450 = vmatprep.subr.mxu0 0.0
    %1451 = vmatpush2.msra.mxu0 0.0
    %1452 = vmatprep.subr.mxu0 0.0
    %1453 = vmatpush2.msra.mxu0 0.0
    %1454 = vmatprep.subr.mxu0 0.0
    %1455 = vmatpush2.msra.mxu0 0.0
    %1456 = vmatprep.subr.mxu0 0.0
    %1457 = vmatpush2.msra.mxu0 0.0
    %1458 = vmatprep.subr.mxu0 0.0
    %1459 = vmatpush2.msra.mxu0 0.0
    %1460 = vmatprep.subr.mxu0 0.0
    %1461 = vmatpush2.msra.mxu0 0.0
    %1462 = vmatprep.subr.mxu0 0.0
    %1463 = vmatpush2.msra.mxu0 0.0
    %1464 = vmatprep.subr.mxu0 0.0
    %1465 = vmatpush2.msra.mxu0 0.0
    %1466 = vmatprep.subr.mxu0 0.0
    %1467 = vmatpush2.msra.mxu0 0.0
    %1468 = vmatprep.subr.mxu0 0.0
    %1469 = vmatpush2.msra.mxu0 0.0
    %1470 = vmatprep.subr.mxu0 0.0
    %1471 = vmatpush2.msra.mxu0 0.0
    %1472 = vmatprep.subr.mxu0 0.0
    %1473 = vmatpush2.msra.mxu0 0.0
    %1474 = vmatprep.subr.mxu0 0.0
    %1475 = vmatpush2.msra.mxu0 0.0
    %1476 = vmatprep.subr.mxu0 0.0
    %1477 = vmatpush2.msra.mxu0 0.0
    %1478 = vmatprep.subr.mxu0 0.0
    %1479 = vmatpush2.msra.mxu0 0.0
    %1480 = vmatprep.mubr.f32.mxu0 0.0
    %v1481 = vand.u32 %v388, 4294901760
    %1482 = vmatmul.mubr.f32.gmra.mxu0 %v1481
    %v1483 = vpop.f32.mrf.mxu0
    %v1484 = vadd.f32 %v1404, %v1483
    %v1485 = vpop.f32.mrf.mxu0
    %v1486 = vadd.f32 %v1406, %v1485
    %1487 = vdwg.mxu0
    %v1488 = vmax.f32 %v941, 0.0
    %v1489 = vmax.f32 %v943, 0.0
    %v1490 = vmax.f32 %v1484, 0.0
    %v1491 = vmax.f32 %v1486, 0.0
    %1492 = vset.pattern.permute.xlu0 40
    %1493 = vperm.xlu0 %1492, %v385
    %v1494 = vpop.permute.xlu0 %1493
    %1496 = vrot.lane.b32.xlu0 %v385, 96
    %v1497 = vpop.permute.xlu0 %1496
    %vm1498 = vcmask 64512
    %v1499 = vsel %vm1498, %v1497, 0
    %1501 = vmatprep.subr.mxu0 0.0
    %1502 = vmatpush1.msra.mxu0 0.0
    %1503 = vmatprep.subr.mxu0 0.0
    %1504 = vmatpush1.msra.mxu0 0.0
    %1505 = vmatprep.subr.mxu0 0.0
    %1506 = vmatpush1.msra.mxu0 0.0
    %1507 = vmatprep.subr.mxu0 0.0
    %1508 = vmatpush1.msra.mxu0 0.0
    %1509 = vmatprep.subr.mxu0 0.0
    %1510 = vmatpush1.msra.mxu0 0.0
    %1511 = vmatprep.subr.mxu0 0.0
    %1512 = vmatpush1.msra.mxu0 0.0
    %1513 = vmatprep.subr.mxu0 0.0
    %1514 = vmatpush1.msra.mxu0 0.0
    %1515 = vmatprep.subr.mxu0 0.0
    %1516 = vmatpush1.msra.mxu0 0.0
    %1517 = vmatprep.subr.mxu0 0.0
    %1518 = vmatpush1.msra.mxu0 0.0
    %1519 = vmatprep.subr.mxu0 0.0
    %1520 = vmatpush1.msra.mxu0 0.0
    %1521 = vmatprep.subr.mxu0 0.0
    %1522 = vmatpush1.msra.mxu0 0.0
    %1523 = vmatprep.subr.mxu0 0.0
    %1524 = vmatpush1.msra.mxu0 0.0
    %1525 = vmatprep.subr.mxu0 0.0
    %1526 = vmatpush1.msra.mxu0 0.0
    %1527 = vmatprep.subr.mxu0 0.0
    %1528 = vmatpush1.msra.mxu0 0.0
    %1529 = vmatprep.subr.mxu0 0.0
    %1530 = vmatpush1.msra.mxu0 0.0
    %v1531 = vand.u32 %v1489, 4294901760
    %1532 = vmatprep.subr.mxu0 %v1531
    %v1533 = vand.u32 %v1488, 4294901760
    %1534 = vmatpush1.msra.mxu0 %v1533
    %1535 = vmatprep.subr.mxu0 0.0
    %1536 = vmatpush2.msra.mxu0 0.0
    %1537 = vmatprep.subr.mxu0 0.0
    %1538 = vmatpush2.msra.mxu0 0.0
    %1539 = vmatprep.subr.mxu0 0.0
    %1540 = vmatpush2.msra.mxu0 0.0
    %1541 = vmatprep.subr.mxu0 0.0
    %1542 = vmatpush2.msra.mxu0 0.0
    %1543 = vmatprep.subr.mxu0 0.0
    %1544 = vmatpush2.msra.mxu0 0.0
    %1545 = vmatprep.subr.mxu0 0.0
    %1546 = vmatpush2.msra.mxu0 0.0
    %1547 = vmatprep.subr.mxu0 0.0
    %1548 = vmatpush2.msra.mxu0 0.0
    %1549 = vmatprep.subr.mxu0 0.0
    %1550 = vmatpush2.msra.mxu0 0.0
    %1551 = vmatprep.subr.mxu0 0.0
    %1552 = vmatpush2.msra.mxu0 0.0
    %1553 = vmatprep.subr.mxu0 0.0
    %1554 = vmatpush2.msra.mxu0 0.0
    %1555 = vmatprep.subr.mxu0 0.0
    %1556 = vmatpush2.msra.mxu0 0.0
    %1557 = vmatprep.subr.mxu0 0.0
    %1558 = vmatpush2.msra.mxu0 0.0
    %1559 = vmatprep.subr.mxu0 0.0
    %1560 = vmatpush2.msra.mxu0 0.0
    %1561 = vmatprep.subr.mxu0 0.0
    %1562 = vmatpush2.msra.mxu0 0.0
    %1563 = vmatprep.subr.mxu0 0.0
    %1564 = vmatpush2.msra.mxu0 0.0
    %1565 = vmatprep.subr.mxu0 0.0
    %1566 = vmatpush2.msra.mxu0 0.0
    %1567 = vmatprep.mubr.f32.mxu0 0.0
    %v1568 = vand.u32 %v1499, 4294901760
    %v1569 = vsub.f32 %v1499, %v1568
    %v1570 = vand.u32 %v1569, 4294901760
    %v1571 = vsub.f32 %v1569, %v1570
    %v1572 = vand.u32 %v1571, 4294901760
    %1573 = vmatmul.mubr.f32.gmra.mxu0 %v1572
    %v1574 = vpop.f32.mrf.mxu0
    %v1575 = vadd.f32 %v1494, %v1574
    %v1576 = vpop.f32.mrf.mxu0
    %v1577 = vadd.f32 %v1494, %v1576
    %1578 = vdwg.mxu0
    %1579 = vmatprep.subr.mxu0 0.0
    %1580 = vmatpush1.msra.mxu0 0.0
    %1581 = vmatprep.subr.mxu0 0.0
    %1582 = vmatpush1.msra.mxu0 0.0
    %1583 = vmatprep.subr.mxu0 0.0
    %1584 = vmatpush1.msra.mxu0 0.0
    %1585 = vmatprep.subr.mxu0 0.0
    %1586 = vmatpush1.msra.mxu0 0.0
    %1587 = vmatprep.subr.mxu0 0.0
    %1588 = vmatpush1.msra.mxu0 0.0
    %1589 = vmatprep.subr.mxu0 0.0
    %1590 = vmatpush1.msra.mxu0 0.0
    %1591 = vmatprep.subr.mxu0 0.0
    %1592 = vmatpush1.msra.mxu0 0.0
    %1593 = vmatprep.subr.mxu0 0.0
    %1594 = vmatpush1.msra.mxu0 0.0
    %1595 = vmatprep.subr.mxu0 0.0
    %1596 = vmatpush1.msra.mxu0 0.0
    %1597 = vmatprep.subr.mxu0 0.0
    %1598 = vmatpush1.msra.mxu0 0.0
    %1599 = vmatprep.subr.mxu0 0.0
    %1600 = vmatpush1.msra.mxu0 0.0
    %1601 = vmatprep.subr.mxu0 0.0
    %1602 = vmatpush1.msra.mxu0 0.0
    %1603 = vmatprep.subr.mxu0 0.0
    %1604 = vmatpush1.msra.mxu0 0.0
    %1605 = vmatprep.subr.mxu0 0.0
    %1606 = vmatpush1.msra.mxu0 0.0
    %1607 = vmatprep.subr.mxu0 0.0
    %1608 = vmatpush1.msra.mxu0 0.0
    %v1609 = vand.u32 %v1489, 4294901760
    %v1610 = vsub.f32 %v1489, %v1609
    %v1611 = vand.u32 %v1610, 4294901760
    %v1612 = vsub.f32 %v1610, %v1611
    %v1613 = vand.u32 %v1612, 4294901760
    %1614 = vmatprep.subr.mxu0 %v1613
    %v1615 = vand.u32 %v1488, 4294901760
    %v1616 = vsub.f32 %v1488, %v1615
    %v1617 = vand.u32 %v1616, 4294901760
    %v1618 = vsub.f32 %v1616, %v1617
    %v1619 = vand.u32 %v1618, 4294901760
    %1620 = vmatpush1.msra.mxu0 %v1619
    %1621 = vmatprep.subr.mxu0 0.0
    %1622 = vmatpush2.msra.mxu0 0.0
    %1623 = vmatprep.subr.mxu0 0.0
    %1624 = vmatpush2.msra.mxu0 0.0
    %1625 = vmatprep.subr.mxu0 0.0
    %1626 = vmatpush2.msra.mxu0 0.0
    %1627 = vmatprep.subr.mxu0 0.0
    %1628 = vmatpush2.msra.mxu0 0.0
    %1629 = vmatprep.subr.mxu0 0.0
    %1630 = vmatpush2.msra.mxu0 0.0
    %1631 = vmatprep.subr.mxu0 0.0
    %1632 = vmatpush2.msra.mxu0 0.0
    %1633 = vmatprep.subr.mxu0 0.0
    %1634 = vmatpush2.msra.mxu0 0.0
    %1635 = vmatprep.subr.mxu0 0.0
    %1636 = vmatpush2.msra.mxu0 0.0
    %1637 = vmatprep.subr.mxu0 0.0
    %1638 = vmatpush2.msra.mxu0 0.0
    %1639 = vmatprep.subr.mxu0 0.0
    %1640 = vmatpush2.msra.mxu0 0.0
    %1641 = vmatprep.subr.mxu0 0.0
    %1642 = vmatpush2.msra.mxu0 0.0
    %1643 = vmatprep.subr.mxu0 0.0
    %1644 = vmatpush2.msra.mxu0 0.0
    %1645 = vmatprep.subr.mxu0 0.0
    %1646 = vmatpush2.msra.mxu0 0.0
    %1647 = vmatprep.subr.mxu0 0.0
    %1648 = vmatpush2.msra.mxu0 0.0
    %1649 = vmatprep.subr.mxu0 0.0
    %1650 = vmatpush2.msra.mxu0 0.0
    %1651 = vmatprep.subr.mxu0 0.0
    %1652 = vmatpush2.msra.mxu0 0.0
    %1653 = vmatprep.mubr.f32.mxu0 0.0
    %v1654 = vand.u32 %v1499, 4294901760
    %1655 = vmatmul.mubr.f32.gmra.mxu0 %v1654
    %v1656 = vpop.f32.mrf.mxu0
    %v1657 = vadd.f32 %v1575, %v1656
    %v1658 = vpop.f32.mrf.mxu0
    %v1659 = vadd.f32 %v1577, %v1658
    %1660 = vdwg.mxu0
    %1661 = vmatprep.subr.mxu0 0.0
    %1662 = vmatpush1.msra.mxu0 0.0
    %1663 = vmatprep.subr.mxu0 0.0
    %1664 = vmatpush1.msra.mxu0 0.0
    %1665 = vmatprep.subr.mxu0 0.0
    %1666 = vmatpush1.msra.mxu0 0.0
    %1667 = vmatprep.subr.mxu0 0.0
    %1668 = vmatpush1.msra.mxu0 0.0
    %1669 = vmatprep.subr.mxu0 0.0
    %1670 = vmatpush1.msra.mxu0 0.0
    %1671 = vmatprep.subr.mxu0 0.0
    %1672 = vmatpush1.msra.mxu0 0.0
    %1673 = vmatprep.subr.mxu0 0.0
    %1674 = vmatpush1.msra.mxu0 0.0
    %1675 = vmatprep.subr.mxu0 0.0
    %1676 = vmatpush1.msra.mxu0 0.0
    %1677 = vmatprep.subr.mxu0 0.0
    %1678 = vmatpush1.msra.mxu0 0.0
    %1679 = vmatprep.subr.mxu0 0.0
    %1680 = vmatpush1.msra.mxu0 0.0
    %1681 = vmatprep.subr.mxu0 0.0
    %1682 = vmatpush1.msra.mxu0 0.0
    %1683 = vmatprep.subr.mxu0 0.0
    %1684 = vmatpush1.msra.mxu0 0.0
    %1685 = vmatprep.subr.mxu0 0.0
    %1686 = vmatpush1.msra.mxu0 0.0
    %1687 = vmatprep.subr.mxu0 0.0
    %1688 = vmatpush1.msra.mxu0 0.0
    %1689 = vmatprep.subr.mxu0 0.0
    %1690 = vmatpush1.msra.mxu0 0.0
    %v1691 = vand.u32 %v1489, 4294901760
    %v1692 = vsub.f32 %v1489, %v1691
    %1693 = vmatprep.subr.mxu0 %v1692
    %v1694 = vand.u32 %v1488, 4294901760
    %v1695 = vsub.f32 %v1488, %v1694
    %1696 = vmatpush1.msra.mxu0 %v1695
    %1697 = vmatprep.subr.mxu0 0.0
    %1698 = vmatpush2.msra.mxu0 0.0
    %1699 = vmatprep.subr.mxu0 0.0
    %1700 = vmatpush2.msra.mxu0 0.0
    %1701 = vmatprep.subr.mxu0 0.0
    %1702 = vmatpush2.msra.mxu0 0.0
    %1703 = vmatprep.subr.mxu0 0.0
    %1704 = vmatpush2.msra.mxu0 0.0
    %1705 = vmatprep.subr.mxu0 0.0
    %1706 = vmatpush2.msra.mxu0 0.0
    %1707 = vmatprep.subr.mxu0 0.0
    %1708 = vmatpush2.msra.mxu0 0.0
    %1709 = vmatprep.subr.mxu0 0.0
    %1710 = vmatpush2.msra.mxu0 0.0
    %1711 = vmatprep.subr.mxu0 0.0
    %1712 = vmatpush2.msra.mxu0 0.0
    %1713 = vmatprep.subr.mxu0 0.0
    %1714 = vmatpush2.msra.mxu0 0.0
    %1715 = vmatprep.subr.mxu0 0.0
    %1716 = vmatpush2.msra.mxu0 0.0
    %1717 = vmatprep.subr.mxu0 0.0
    %1718 = vmatpush2.msra.mxu0 0.0
    %1719 = vmatprep.subr.mxu0 0.0
    %1720 = vmatpush2.msra.mxu0 0.0
    %1721 = vmatprep.subr.mxu0 0.0
    %1722 = vmatpush2.msra.mxu0 0.0
    %1723 = vmatprep.subr.mxu0 0.0
    %1724 = vmatpush2.msra.mxu0 0.0
    %1725 = vmatprep.subr.mxu0 0.0
    %1726 = vmatpush2.msra.mxu0 0.0
    %1727 = vmatprep.subr.mxu0 0.0
    %1728 = vmatpush2.msra.mxu0 0.0
    %1729 = vmatprep.mubr.f32.mxu0 0.0
    %v1730 = vand.u32 %v1499, 4294901760
    %v1731 = vsub.f32 %v1499, %v1730
    %1732 = vmatmul.mubr.f32.gmra.mxu0 %v1731
    %v1733 = vpop.f32.mrf.mxu0
    %v1734 = vadd.f32 %v1657, %v1733
    %v1735 = vpop.f32.mrf.mxu0
    %v1736 = vadd.f32 %v1659, %v1735
    %1737 = vdwg.mxu0
    %1738 = vmatprep.subr.mxu0 0.0
    %1739 = vmatpush1.msra.mxu0 0.0
    %1740 = vmatprep.subr.mxu0 0.0
    %1741 = vmatpush1.msra.mxu0 0.0
    %1742 = vmatprep.subr.mxu0 0.0
    %1743 = vmatpush1.msra.mxu0 0.0
    %1744 = vmatprep.subr.mxu0 0.0
    %1745 = vmatpush1.msra.mxu0 0.0
    %1746 = vmatprep.subr.mxu0 0.0
    %1747 = vmatpush1.msra.mxu0 0.0
    %1748 = vmatprep.subr.mxu0 0.0
    %1749 = vmatpush1.msra.mxu0 0.0
    %1750 = vmatprep.subr.mxu0 0.0
    %1751 = vmatpush1.msra.mxu0 0.0
    %1752 = vmatprep.subr.mxu0 0.0
    %1753 = vmatpush1.msra.mxu0 0.0
    %1754 = vmatprep.subr.mxu0 0.0
    %1755 = vmatpush1.msra.mxu0 0.0
    %1756 = vmatprep.subr.mxu0 0.0
    %1757 = vmatpush1.msra.mxu0 0.0
    %1758 = vmatprep.subr.mxu0 0.0
    %1759 = vmatpush1.msra.mxu0 0.0
    %1760 = vmatprep.subr.mxu0 0.0
    %1761 = vmatpush1.msra.mxu0 0.0
    %1762 = vmatprep.subr.mxu0 0.0
    %1763 = vmatpush1.msra.mxu0 0.0
    %1764 = vmatprep.subr.mxu0 0.0
    %1765 = vmatpush1.msra.mxu0 0.0
    %1766 = vmatprep.subr.mxu0 0.0
    %1767 = vmatpush1.msra.mxu0 0.0
    %v1768 = vand.u32 %v1489, 4294901760
    %1769 = vmatprep.subr.mxu0 %v1768
    %v1770 = vand.u32 %v1488, 4294901760
    %1771 = vmatpush1.msra.mxu0 %v1770
    %1772 = vmatprep.subr.mxu0 0.0
    %1773 = vmatpush2.msra.mxu0 0.0
    %1774 = vmatprep.subr.mxu0 0.0
    %1775 = vmatpush2.msra.mxu0 0.0
    %1776 = vmatprep.subr.mxu0 0.0
    %1777 = vmatpush2.msra.mxu0 0.0
    %1778 = vmatprep.subr.mxu0 0.0
    %1779 = vmatpush2.msra.mxu0 0.0
    %1780 = vmatprep.subr.mxu0 0.0
    %1781 = vmatpush2.msra.mxu0 0.0
    %1782 = vmatprep.subr.mxu0 0.0
    %1783 = vmatpush2.msra.mxu0 0.0
    %1784 = vmatprep.subr.mxu0 0.0
    %1785 = vmatpush2.msra.mxu0 0.0
    %1786 = vmatprep.subr.mxu0 0.0
    %1787 = vmatpush2.msra.mxu0 0.0
    %1788 = vmatprep.subr.mxu0 0.0
    %1789 = vmatpush2.msra.mxu0 0.0
    %1790 = vmatprep.subr.mxu0 0.0
    %1791 = vmatpush2.msra.mxu0 0.0
    %1792 = vmatprep.subr.mxu0 0.0
    %1793 = vmatpush2.msra.mxu0 0.0
    %1794 = vmatprep.subr.mxu0 0.0
    %1795 = vmatpush2.msra.mxu0 0.0
    %1796 = vmatprep.subr.mxu0 0.0
    %1797 = vmatpush2.msra.mxu0 0.0
    %1798 = vmatprep.subr.mxu0 0.0
    %1799 = vmatpush2.msra.mxu0 0.0
    %1800 = vmatprep.subr.mxu0 0.0
    %1801 = vmatpush2.msra.mxu0 0.0
    %1802 = vmatprep.subr.mxu0 0.0
    %1803 = vmatpush2.msra.mxu0 0.0
    %1804 = vmatprep.mubr.f32.mxu0 0.0
    %v1805 = vand.u32 %v1499, 4294901760
    %v1806 = vsub.f32 %v1499, %v1805
    %v1807 = vand.u32 %v1806, 4294901760
    %1808 = vmatmul.mubr.f32.gmra.mxu0 %v1807
    %v1809 = vpop.f32.mrf.mxu0
    %v1810 = vadd.f32 %v1734, %v1809
    %v1811 = vpop.f32.mrf.mxu0
    %v1812 = vadd.f32 %v1736, %v1811
    %1813 = vdwg.mxu0
    %1814 = vmatprep.subr.mxu0 0.0
    %1815 = vmatpush1.msra.mxu0 0.0
    %1816 = vmatprep.subr.mxu0 0.0
    %1817 = vmatpush1.msra.mxu0 0.0
    %1818 = vmatprep.subr.mxu0 0.0
    %1819 = vmatpush1.msra.mxu0 0.0
    %1820 = vmatprep.subr.mxu0 0.0
    %1821 = vmatpush1.msra.mxu0 0.0
    %1822 = vmatprep.subr.mxu0 0.0
    %1823 = vmatpush1.msra.mxu0 0.0
    %1824 = vmatprep.subr.mxu0 0.0
    %1825 = vmatpush1.msra.mxu0 0.0
    %1826 = vmatprep.subr.mxu0 0.0
    %1827 = vmatpush1.msra.mxu0 0.0
    %1828 = vmatprep.subr.mxu0 0.0
    %1829 = vmatpush1.msra.mxu0 0.0
    %1830 = vmatprep.subr.mxu0 0.0
    %1831 = vmatpush1.msra.mxu0 0.0
    %1832 = vmatprep.subr.mxu0 0.0
    %1833 = vmatpush1.msra.mxu0 0.0
    %1834 = vmatprep.subr.mxu0 0.0
    %1835 = vmatpush1.msra.mxu0 0.0
    %1836 = vmatprep.subr.mxu0 0.0
    %1837 = vmatpush1.msra.mxu0 0.0
    %1838 = vmatprep.subr.mxu0 0.0
    %1839 = vmatpush1.msra.mxu0 0.0
    %1840 = vmatprep.subr.mxu0 0.0
    %1841 = vmatpush1.msra.mxu0 0.0
    %1842 = vmatprep.subr.mxu0 0.0
    %1843 = vmatpush1.msra.mxu0 0.0
    %v1844 = vand.u32 %v1489, 4294901760
    %v1845 = vsub.f32 %v1489, %v1844
    %v1846 = vand.u32 %v1845, 4294901760
    %1847 = vmatprep.subr.mxu0 %v1846
    %v1848 = vand.u32 %v1488, 4294901760
    %v1849 = vsub.f32 %v1488, %v1848
    %v1850 = vand.u32 %v1849, 4294901760
    %1851 = vmatpush1.msra.mxu0 %v1850
    %1852 = vmatprep.subr.mxu0 0.0
    %1853 = vmatpush2.msra.mxu0 0.0
    %1854 = vmatprep.subr.mxu0 0.0
    %1855 = vmatpush2.msra.mxu0 0.0
    %1856 = vmatprep.subr.mxu0 0.0
    %1857 = vmatpush2.msra.mxu0 0.0
    %1858 = vmatprep.subr.mxu0 0.0
    %1859 = vmatpush2.msra.mxu0 0.0
    %1860 = vmatprep.subr.mxu0 0.0
    %1861 = vmatpush2.msra.mxu0 0.0
    %1862 = vmatprep.subr.mxu0 0.0
    %1863 = vmatpush2.msra.mxu0 0.0
    %1864 = vmatprep.subr.mxu0 0.0
    %1865 = vmatpush2.msra.mxu0 0.0
    %1866 = vmatprep.subr.mxu0 0.0
    %1867 = vmatpush2.msra.mxu0 0.0
    %1868 = vmatprep.subr.mxu0 0.0
    %1869 = vmatpush2.msra.mxu0 0.0
    %1870 = vmatprep.subr.mxu0 0.0
    %1871 = vmatpush2.msra.mxu0 0.0
    %1872 = vmatprep.subr.mxu0 0.0
    %1873 = vmatpush2.msra.mxu0 0.0
    %1874 = vmatprep.subr.mxu0 0.0
    %1875 = vmatpush2.msra.mxu0 0.0
    %1876 = vmatprep.subr.mxu0 0.0
    %1877 = vmatpush2.msra.mxu0 0.0
    %1878 = vmatprep.subr.mxu0 0.0
    %1879 = vmatpush2.msra.mxu0 0.0
    %1880 = vmatprep.subr.mxu0 0.0
    %1881 = vmatpush2.msra.mxu0 0.0
    %1882 = vmatprep.subr.mxu0 0.0
    %1883 = vmatpush2.msra.mxu0 0.0
    %1884 = vmatprep.mubr.f32.mxu0 0.0
    %v1885 = vand.u32 %v1499, 4294901760
    %1886 = vmatmul.mubr.f32.gmra.mxu0 %v1885
    %v1887 = vpop.f32.mrf.mxu0
    %v1888 = vadd.f32 %v1810, %v1887
    %v1889 = vpop.f32.mrf.mxu0
    %v1890 = vadd.f32 %v1812, %v1889
    %1891 = vdwg.mxu0
    %1892 = vmatprep.subr.mxu0 0.0
    %1893 = vmatpush1.msra.mxu0 0.0
    %1894 = vmatprep.subr.mxu0 0.0
    %1895 = vmatpush1.msra.mxu0 0.0
    %1896 = vmatprep.subr.mxu0 0.0
    %1897 = vmatpush1.msra.mxu0 0.0
    %1898 = vmatprep.subr.mxu0 0.0
    %1899 = vmatpush1.msra.mxu0 0.0
    %1900 = vmatprep.subr.mxu0 0.0
    %1901 = vmatpush1.msra.mxu0 0.0
    %1902 = vmatprep.subr.mxu0 0.0
    %1903 = vmatpush1.msra.mxu0 0.0
    %1904 = vmatprep.subr.mxu0 0.0
    %1905 = vmatpush1.msra.mxu0 0.0
    %1906 = vmatprep.subr.mxu0 0.0
    %1907 = vmatpush1.msra.mxu0 0.0
    %1908 = vmatprep.subr.mxu0 0.0
    %1909 = vmatpush1.msra.mxu0 0.0
    %1910 = vmatprep.subr.mxu0 0.0
    %1911 = vmatpush1.msra.mxu0 0.0
    %1912 = vmatprep.subr.mxu0 0.0
    %1913 = vmatpush1.msra.mxu0 0.0
    %1914 = vmatprep.subr.mxu0 0.0
    %1915 = vmatpush1.msra.mxu0 0.0
    %1916 = vmatprep.subr.mxu0 0.0
    %1917 = vmatpush1.msra.mxu0 0.0
    %1918 = vmatprep.subr.mxu0 0.0
    %1919 = vmatpush1.msra.mxu0 0.0
    %1920 = vmatprep.subr.mxu0 0.0
    %1921 = vmatpush1.msra.mxu0 0.0
    %v1922 = vand.u32 %v1489, 4294901760
    %1923 = vmatprep.subr.mxu0 %v1922
    %v1924 = vand.u32 %v1488, 4294901760
    %1925 = vmatpush1.msra.mxu0 %v1924
    %1926 = vmatprep.subr.mxu0 0.0
    %1927 = vmatpush2.msra.mxu0 0.0
    %1928 = vmatprep.subr.mxu0 0.0
    %1929 = vmatpush2.msra.mxu0 0.0
    %1930 = vmatprep.subr.mxu0 0.0
    %1931 = vmatpush2.msra.mxu0 0.0
    %1932 = vmatprep.subr.mxu0 0.0
    %1933 = vmatpush2.msra.mxu0 0.0
    %1934 = vmatprep.subr.mxu0 0.0
    %1935 = vmatpush2.msra.mxu0 0.0
    %1936 = vmatprep.subr.mxu0 0.0
    %1937 = vmatpush2.msra.mxu0 0.0
    %1938 = vmatprep.subr.mxu0 0.0
    %1939 = vmatpush2.msra.mxu0 0.0
    %1940 = vmatprep.subr.mxu0 0.0
    %1941 = vmatpush2.msra.mxu0 0.0
    %1942 = vmatprep.subr.mxu0 0.0
    %1943 = vmatpush2.msra.mxu0 0.0
    %1944 = vmatprep.subr.mxu0 0.0
    %1945 = vmatpush2.msra.mxu0 0.0
    %1946 = vmatprep.subr.mxu0 0.0
    %1947 = vmatpush2.msra.mxu0 0.0
    %1948 = vmatprep.subr.mxu0 0.0
    %1949 = vmatpush2.msra.mxu0 0.0
    %1950 = vmatprep.subr.mxu0 0.0
    %1951 = vmatpush2.msra.mxu0 0.0
    %1952 = vmatprep.subr.mxu0 0.0
    %1953 = vmatpush2.msra.mxu0 0.0
    %1954 = vmatprep.subr.mxu0 0.0
    %1955 = vmatpush2.msra.mxu0 0.0
    %1956 = vmatprep.subr.mxu0 0.0
    %1957 = vmatpush2.msra.mxu0 0.0
    %1958 = vmatprep.mubr.f32.mxu0 0.0
    %v1959 = vand.u32 %v1499, 4294901760
    %1960 = vmatmul.mubr.f32.gmra.mxu0 %v1959
    %v1961 = vpop.f32.mrf.mxu0
    %v1962 = vadd.f32 %v1888, %v1961
    %v1963 = vpop.f32.mrf.mxu0
    %v1964 = vadd.f32 %v1890, %v1963
    %1965 = vdwg.mxu0
    %1966 = vmatprep.subr.mxu0 0.0
    %1967 = vmatpush1.msra.mxu0 0.0
    %1968 = vmatprep.subr.mxu0 0.0
    %1969 = vmatpush1.msra.mxu0 0.0
    %1970 = vmatprep.subr.mxu0 0.0
    %1971 = vmatpush1.msra.mxu0 0.0
    %1972 = vmatprep.subr.mxu0 0.0
    %1973 = vmatpush1.msra.mxu0 0.0
    %1974 = vmatprep.subr.mxu0 0.0
    %1975 = vmatpush1.msra.mxu0 0.0
    %1976 = vmatprep.subr.mxu0 0.0
    %1977 = vmatpush1.msra.mxu0 0.0
    %1978 = vmatprep.subr.mxu0 0.0
    %1979 = vmatpush1.msra.mxu0 0.0
    %1980 = vmatprep.subr.mxu0 0.0
    %1981 = vmatpush1.msra.mxu0 0.0
    %1982 = vmatprep.subr.mxu0 0.0
    %1983 = vmatpush1.msra.mxu0 0.0
    %1984 = vmatprep.subr.mxu0 0.0
    %1985 = vmatpush1.msra.mxu0 0.0
    %1986 = vmatprep.subr.mxu0 0.0
    %1987 = vmatpush1.msra.mxu0 0.0
    %1988 = vmatprep.subr.mxu0 0.0
    %1989 = vmatpush1.msra.mxu0 0.0
    %1990 = vmatprep.subr.mxu0 0.0
    %1991 = vmatpush1.msra.mxu0 0.0
    %1992 = vmatprep.subr.mxu0 0.0
    %1993 = vmatpush1.msra.mxu0 0.0
    %1994 = vmatprep.subr.mxu0 0.0
    %1995 = vmatpush1.msra.mxu0 0.0
    %v1996 = vand.u32 %v1491, 4294901760
    %1997 = vmatprep.subr.mxu0 %v1996
    %v1998 = vand.u32 %v1490, 4294901760
    %1999 = vmatpush1.msra.mxu0 %v1998
    %2000 = vmatprep.subr.mxu0 0.0
    %2001 = vmatpush2.msra.mxu0 0.0
    %2002 = vmatprep.subr.mxu0 0.0
    %2003 = vmatpush2.msra.mxu0 0.0
    %2004 = vmatprep.subr.mxu0 0.0
    %2005 = vmatpush2.msra.mxu0 0.0
    %2006 = vmatprep.subr.mxu0 0.0
    %2007 = vmatpush2.msra.mxu0 0.0
    %2008 = vmatprep.subr.mxu0 0.0
    %2009 = vmatpush2.msra.mxu0 0.0
    %2010 = vmatprep.subr.mxu0 0.0
    %2011 = vmatpush2.msra.mxu0 0.0
    %2012 = vmatprep.subr.mxu0 0.0
    %2013 = vmatpush2.msra.mxu0 0.0
    %2014 = vmatprep.subr.mxu0 0.0
    %2015 = vmatpush2.msra.mxu0 0.0
    %2016 = vmatprep.subr.mxu0 0.0
    %2017 = vmatpush2.msra.mxu0 0.0
    %2018 = vmatprep.subr.mxu0 0.0
    %2019 = vmatpush2.msra.mxu0 0.0
    %2020 = vmatprep.subr.mxu0 0.0
    %2021 = vmatpush2.msra.mxu0 0.0
    %2022 = vmatprep.subr.mxu0 0.0
    %2023 = vmatpush2.msra.mxu0 0.0
    %2024 = vmatprep.subr.mxu0 0.0
    %2025 = vmatpush2.msra.mxu0 0.0
    %2026 = vmatprep.subr.mxu0 0.0
    %2027 = vmatpush2.msra.mxu0 0.0
    %2028 = vmatprep.subr.mxu0 0.0
    %2029 = vmatpush2.msra.mxu0 0.0
    %2030 = vmatprep.subr.mxu0 0.0
    %2031 = vmatpush2.msra.mxu0 0.0
    %2032 = vmatprep.mubr.f32.mxu0 0.0
    %v2033 = vand.u32 %v1499, 4294901760
    %v2034 = vsub.f32 %v1499, %v2033
    %v2035 = vand.u32 %v2034, 4294901760
    %v2036 = vsub.f32 %v2034, %v2035
    %v2037 = vand.u32 %v2036, 4294901760
    %2038 = vmatmul.mubr.f32.gmra.mxu0 %v2037
    %v2039 = vpop.f32.mrf.mxu0
    %v2040 = vadd.f32 %v1494, %v2039
    %v2041 = vpop.f32.mrf.mxu0
    %v2042 = vadd.f32 %v1494, %v2041
    %2043 = vdwg.mxu0
    %2044 = vmatprep.subr.mxu0 0.0
    %2045 = vmatpush1.msra.mxu0 0.0
    %2046 = vmatprep.subr.mxu0 0.0
    %2047 = vmatpush1.msra.mxu0 0.0
    %2048 = vmatprep.subr.mxu0 0.0
    %2049 = vmatpush1.msra.mxu0 0.0
    %2050 = vmatprep.subr.mxu0 0.0
    %2051 = vmatpush1.msra.mxu0 0.0
    %2052 = vmatprep.subr.mxu0 0.0
    %2053 = vmatpush1.msra.mxu0 0.0
    %2054 = vmatprep.subr.mxu0 0.0
    %2055 = vmatpush1.msra.mxu0 0.0
    %2056 = vmatprep.subr.mxu0 0.0
    %2057 = vmatpush1.msra.mxu0 0.0
    %2058 = vmatprep.subr.mxu0 0.0
    %2059 = vmatpush1.msra.mxu0 0.0
    %2060 = vmatprep.subr.mxu0 0.0
    %2061 = vmatpush1.msra.mxu0 0.0
    %2062 = vmatprep.subr.mxu0 0.0
    %2063 = vmatpush1.msra.mxu0 0.0
    %2064 = vmatprep.subr.mxu0 0.0
    %2065 = vmatpush1.msra.mxu0 0.0
    %2066 = vmatprep.subr.mxu0 0.0
    %2067 = vmatpush1.msra.mxu0 0.0
    %2068 = vmatprep.subr.mxu0 0.0
    %2069 = vmatpush1.msra.mxu0 0.0
    %2070 = vmatprep.subr.mxu0 0.0
    %2071 = vmatpush1.msra.mxu0 0.0
    %2072 = vmatprep.subr.mxu0 0.0
    %2073 = vmatpush1.msra.mxu0 0.0
    %v2074 = vand.u32 %v1491, 4294901760
    %v2075 = vsub.f32 %v1491, %v2074
    %v2076 = vand.u32 %v2075, 4294901760
    %v2077 = vsub.f32 %v2075, %v2076
    %v2078 = vand.u32 %v2077, 4294901760
    %2079 = vmatprep.subr.mxu0 %v2078
    %v2080 = vand.u32 %v1490, 4294901760
    %v2081 = vsub.f32 %v1490, %v2080
    %v2082 = vand.u32 %v2081, 4294901760
    %v2083 = vsub.f32 %v2081, %v2082
    %v2084 = vand.u32 %v2083, 4294901760
    %2085 = vmatpush1.msra.mxu0 %v2084
    %2086 = vmatprep.subr.mxu0 0.0
    %2087 = vmatpush2.msra.mxu0 0.0
    %2088 = vmatprep.subr.mxu0 0.0
    %2089 = vmatpush2.msra.mxu0 0.0
    %2090 = vmatprep.subr.mxu0 0.0
    %2091 = vmatpush2.msra.mxu0 0.0
    %2092 = vmatprep.subr.mxu0 0.0
    %2093 = vmatpush2.msra.mxu0 0.0
    %2094 = vmatprep.subr.mxu0 0.0
    %2095 = vmatpush2.msra.mxu0 0.0
    %2096 = vmatprep.subr.mxu0 0.0
    %2097 = vmatpush2.msra.mxu0 0.0
    %2098 = vmatprep.subr.mxu0 0.0
    %2099 = vmatpush2.msra.mxu0 0.0
    %2100 = vmatprep.subr.mxu0 0.0
    %2101 = vmatpush2.msra.mxu0 0.0
    %2102 = vmatprep.subr.mxu0 0.0
    %2103 = vmatpush2.msra.mxu0 0.0
    %2104 = vmatprep.subr.mxu0 0.0
    %2105 = vmatpush2.msra.mxu0 0.0
    %2106 = vmatprep.subr.mxu0 0.0
    %2107 = vmatpush2.msra.mxu0 0.0
    %2108 = vmatprep.subr.mxu0 0.0
    %2109 = vmatpush2.msra.mxu0 0.0
    %2110 = vmatprep.subr.mxu0 0.0
    %2111 = vmatpush2.msra.mxu0 0.0
    %2112 = vmatprep.subr.mxu0 0.0
    %2113 = vmatpush2.msra.mxu0 0.0
    %2114 = vmatprep.subr.mxu0 0.0
    %2115 = vmatpush2.msra.mxu0 0.0
    %2116 = vmatprep.subr.mxu0 0.0
    %2117 = vmatpush2.msra.mxu0 0.0
    %2118 = vmatprep.mubr.f32.mxu0 0.0
    %v2119 = vand.u32 %v1499, 4294901760
    %2120 = vmatmul.mubr.f32.gmra.mxu0 %v2119
    %v2121 = vpop.f32.mrf.mxu0
    %v2122 = vadd.f32 %v2040, %v2121
    %v2123 = vpop.f32.mrf.mxu0
    %v2124 = vadd.f32 %v2042, %v2123
    %2125 = vdwg.mxu0
    %2126 = vmatprep.subr.mxu0 0.0
    %2127 = vmatpush1.msra.mxu0 0.0
    %2128 = vmatprep.subr.mxu0 0.0
    %2129 = vmatpush1.msra.mxu0 0.0
    %2130 = vmatprep.subr.mxu0 0.0
    %2131 = vmatpush1.msra.mxu0 0.0
    %2132 = vmatprep.subr.mxu0 0.0
    %2133 = vmatpush1.msra.mxu0 0.0
    %2134 = vmatprep.subr.mxu0 0.0
    %2135 = vmatpush1.msra.mxu0 0.0
    %2136 = vmatprep.subr.mxu0 0.0
    %2137 = vmatpush1.msra.mxu0 0.0
    %2138 = vmatprep.subr.mxu0 0.0
    %2139 = vmatpush1.msra.mxu0 0.0
    %2140 = vmatprep.subr.mxu0 0.0
    %2141 = vmatpush1.msra.mxu0 0.0
    %2142 = vmatprep.subr.mxu0 0.0
    %2143 = vmatpush1.msra.mxu0 0.0
    %2144 = vmatprep.subr.mxu0 0.0
    %2145 = vmatpush1.msra.mxu0 0.0
    %2146 = vmatprep.subr.mxu0 0.0
    %2147 = vmatpush1.msra.mxu0 0.0
    %2148 = vmatprep.subr.mxu0 0.0
    %2149 = vmatpush1.msra.mxu0 0.0
    %2150 = vmatprep.subr.mxu0 0.0
    %2151 = vmatpush1.msra.mxu0 0.0
    %2152 = vmatprep.subr.mxu0 0.0
    %2153 = vmatpush1.msra.mxu0 0.0
    %2154 = vmatprep.subr.mxu0 0.0
    %2155 = vmatpush1.msra.mxu0 0.0
    %v2156 = vand.u32 %v1491, 4294901760
    %v2157 = vsub.f32 %v1491, %v2156
    %2158 = vmatprep.subr.mxu0 %v2157
    %v2159 = vand.u32 %v1490, 4294901760
    %v2160 = vsub.f32 %v1490, %v2159
    %2161 = vmatpush1.msra.mxu0 %v2160
    %2162 = vmatprep.subr.mxu0 0.0
    %2163 = vmatpush2.msra.mxu0 0.0
    %2164 = vmatprep.subr.mxu0 0.0
    %2165 = vmatpush2.msra.mxu0 0.0
    %2166 = vmatprep.subr.mxu0 0.0
    %2167 = vmatpush2.msra.mxu0 0.0
    %2168 = vmatprep.subr.mxu0 0.0
    %2169 = vmatpush2.msra.mxu0 0.0
    %2170 = vmatprep.subr.mxu0 0.0
    %2171 = vmatpush2.msra.mxu0 0.0
    %2172 = vmatprep.subr.mxu0 0.0
    %2173 = vmatpush2.msra.mxu0 0.0
    %2174 = vmatprep.subr.mxu0 0.0
    %2175 = vmatpush2.msra.mxu0 0.0
    %2176 = vmatprep.subr.mxu0 0.0
    %2177 = vmatpush2.msra.mxu0 0.0
    %2178 = vmatprep.subr.mxu0 0.0
    %2179 = vmatpush2.msra.mxu0 0.0
    %2180 = vmatprep.subr.mxu0 0.0
    %2181 = vmatpush2.msra.mxu0 0.0
    %2182 = vmatprep.subr.mxu0 0.0
    %2183 = vmatpush2.msra.mxu0 0.0
    %2184 = vmatprep.subr.mxu0 0.0
    %2185 = vmatpush2.msra.mxu0 0.0
    %2186 = vmatprep.subr.mxu0 0.0
    %2187 = vmatpush2.msra.mxu0 0.0
    %2188 = vmatprep.subr.mxu0 0.0
    %2189 = vmatpush2.msra.mxu0 0.0
    %2190 = vmatprep.subr.mxu0 0.0
    %2191 = vmatpush2.msra.mxu0 0.0
    %2192 = vmatprep.subr.mxu0 0.0
    %2193 = vmatpush2.msra.mxu0 0.0
    %2194 = vmatprep.mubr.f32.mxu0 0.0
    %v2195 = vand.u32 %v1499, 4294901760
    %v2196 = vsub.f32 %v1499, %v2195
    %2197 = vmatmul.mubr.f32.gmra.mxu0 %v2196
    %v2198 = vpop.f32.mrf.mxu0
    %v2199 = vadd.f32 %v2122, %v2198
    %v2200 = vpop.f32.mrf.mxu0
    %v2201 = vadd.f32 %v2124, %v2200
    %2202 = vdwg.mxu0
    %2203 = vmatprep.subr.mxu0 0.0
    %2204 = vmatpush1.msra.mxu0 0.0
    %2205 = vmatprep.subr.mxu0 0.0
    %2206 = vmatpush1.msra.mxu0 0.0
    %2207 = vmatprep.subr.mxu0 0.0
    %2208 = vmatpush1.msra.mxu0 0.0
    %2209 = vmatprep.subr.mxu0 0.0
    %2210 = vmatpush1.msra.mxu0 0.0
    %2211 = vmatprep.subr.mxu0 0.0
    %2212 = vmatpush1.msra.mxu0 0.0
    %2213 = vmatprep.subr.mxu0 0.0
    %2214 = vmatpush1.msra.mxu0 0.0
    %2215 = vmatprep.subr.mxu0 0.0
    %2216 = vmatpush1.msra.mxu0 0.0
    %2217 = vmatprep.subr.mxu0 0.0
    %2218 = vmatpush1.msra.mxu0 0.0
    %2219 = vmatprep.subr.mxu0 0.0
    %2220 = vmatpush1.msra.mxu0 0.0
    %2221 = vmatprep.subr.mxu0 0.0
    %2222 = vmatpush1.msra.mxu0 0.0
    %2223 = vmatprep.subr.mxu0 0.0
    %2224 = vmatpush1.msra.mxu0 0.0
    %2225 = vmatprep.subr.mxu0 0.0
    %2226 = vmatpush1.msra.mxu0 0.0
    %2227 = vmatprep.subr.mxu0 0.0
    %2228 = vmatpush1.msra.mxu0 0.0
    %2229 = vmatprep.subr.mxu0 0.0
    %2230 = vmatpush1.msra.mxu0 0.0
    %2231 = vmatprep.subr.mxu0 0.0
    %2232 = vmatpush1.msra.mxu0 0.0
    %v2233 = vand.u32 %v1491, 4294901760
    %2234 = vmatprep.subr.mxu0 %v2233
    %v2235 = vand.u32 %v1490, 4294901760
    %2236 = vmatpush1.msra.mxu0 %v2235
    %2237 = vmatprep.subr.mxu0 0.0
    %2238 = vmatpush2.msra.mxu0 0.0
    %2239 = vmatprep.subr.mxu0 0.0
    %2240 = vmatpush2.msra.mxu0 0.0
    %2241 = vmatprep.subr.mxu0 0.0
    %2242 = vmatpush2.msra.mxu0 0.0
    %2243 = vmatprep.subr.mxu0 0.0
    %2244 = vmatpush2.msra.mxu0 0.0
    %2245 = vmatprep.subr.mxu0 0.0
    %2246 = vmatpush2.msra.mxu0 0.0
    %2247 = vmatprep.subr.mxu0 0.0
    %2248 = vmatpush2.msra.mxu0 0.0
    %2249 = vmatprep.subr.mxu0 0.0
    %2250 = vmatpush2.msra.mxu0 0.0
    %2251 = vmatprep.subr.mxu0 0.0
    %2252 = vmatpush2.msra.mxu0 0.0
    %2253 = vmatprep.subr.mxu0 0.0
    %2254 = vmatpush2.msra.mxu0 0.0
    %2255 = vmatprep.subr.mxu0 0.0
    %2256 = vmatpush2.msra.mxu0 0.0
    %2257 = vmatprep.subr.mxu0 0.0
    %2258 = vmatpush2.msra.mxu0 0.0
    %2259 = vmatprep.subr.mxu0 0.0
    %2260 = vmatpush2.msra.mxu0 0.0
    %2261 = vmatprep.subr.mxu0 0.0
    %2262 = vmatpush2.msra.mxu0 0.0
    %2263 = vmatprep.subr.mxu0 0.0
    %2264 = vmatpush2.msra.mxu0 0.0
    %2265 = vmatprep.subr.mxu0 0.0
    %2266 = vmatpush2.msra.mxu0 0.0
    %2267 = vmatprep.subr.mxu0 0.0
    %2268 = vmatpush2.msra.mxu0 0.0
    %2269 = vmatprep.mubr.f32.mxu0 0.0
    %v2270 = vand.u32 %v1499, 4294901760
    %v2271 = vsub.f32 %v1499, %v2270
    %v2272 = vand.u32 %v2271, 4294901760
    %2273 = vmatmul.mubr.f32.gmra.mxu0 %v2272
    %v2274 = vpop.f32.mrf.mxu0
    %v2275 = vadd.f32 %v2199, %v2274
    %v2276 = vpop.f32.mrf.mxu0
    %v2277 = vadd.f32 %v2201, %v2276
    %2278 = vdwg.mxu0
    %2279 = vmatprep.subr.mxu0 0.0
    %2280 = vmatpush1.msra.mxu0 0.0
    %2281 = vmatprep.subr.mxu0 0.0
    %2282 = vmatpush1.msra.mxu0 0.0
    %2283 = vmatprep.subr.mxu0 0.0
    %2284 = vmatpush1.msra.mxu0 0.0
    %2285 = vmatprep.subr.mxu0 0.0
    %2286 = vmatpush1.msra.mxu0 0.0
    %2287 = vmatprep.subr.mxu0 0.0
    %2288 = vmatpush1.msra.mxu0 0.0
    %2289 = vmatprep.subr.mxu0 0.0
    %2290 = vmatpush1.msra.mxu0 0.0
    %2291 = vmatprep.subr.mxu0 0.0
    %2292 = vmatpush1.msra.mxu0 0.0
    %2293 = vmatprep.subr.mxu0 0.0
    %2294 = vmatpush1.msra.mxu0 0.0
    %2295 = vmatprep.subr.mxu0 0.0
    %2296 = vmatpush1.msra.mxu0 0.0
    %2297 = vmatprep.subr.mxu0 0.0
    %2298 = vmatpush1.msra.mxu0 0.0
    %2299 = vmatprep.subr.mxu0 0.0
    %2300 = vmatpush1.msra.mxu0 0.0
    %2301 = vmatprep.subr.mxu0 0.0
    %2302 = vmatpush1.msra.mxu0 0.0
    %2303 = vmatprep.subr.mxu0 0.0
    %2304 = vmatpush1.msra.mxu0 0.0
    %2305 = vmatprep.subr.mxu0 0.0
    %2306 = vmatpush1.msra.mxu0 0.0
    %2307 = vmatprep.subr.mxu0 0.0
    %2308 = vmatpush1.msra.mxu0 0.0
    %v2309 = vand.u32 %v1491, 4294901760
    %v2310 = vsub.f32 %v1491, %v2309
    %v2311 = vand.u32 %v2310, 4294901760
    %2312 = vmatprep.subr.mxu0 %v2311
    %v2313 = vand.u32 %v1490, 4294901760
    %v2314 = vsub.f32 %v1490, %v2313
    %v2315 = vand.u32 %v2314, 4294901760
    %2316 = vmatpush1.msra.mxu0 %v2315
    %2317 = vmatprep.subr.mxu0 0.0
    %2318 = vmatpush2.msra.mxu0 0.0
    %2319 = vmatprep.subr.mxu0 0.0
    %2320 = vmatpush2.msra.mxu0 0.0
    %2321 = vmatprep.subr.mxu0 0.0
    %2322 = vmatpush2.msra.mxu0 0.0
    %2323 = vmatprep.subr.mxu0 0.0
    %2324 = vmatpush2.msra.mxu0 0.0
    %2325 = vmatprep.subr.mxu0 0.0
    %2326 = vmatpush2.msra.mxu0 0.0
    %2327 = vmatprep.subr.mxu0 0.0
    %2328 = vmatpush2.msra.mxu0 0.0
    %2329 = vmatprep.subr.mxu0 0.0
    %2330 = vmatpush2.msra.mxu0 0.0
    %2331 = vmatprep.subr.mxu0 0.0
    %2332 = vmatpush2.msra.mxu0 0.0
    %2333 = vmatprep.subr.mxu0 0.0
    %2334 = vmatpush2.msra.mxu0 0.0
    %2335 = vmatprep.subr.mxu0 0.0
    %2336 = vmatpush2.msra.mxu0 0.0
    %2337 = vmatprep.subr.mxu0 0.0
    %2338 = vmatpush2.msra.mxu0 0.0
    %2339 = vmatprep.subr.mxu0 0.0
    %2340 = vmatpush2.msra.mxu0 0.0
    %2341 = vmatprep.subr.mxu0 0.0
    %2342 = vmatpush2.msra.mxu0 0.0
    %2343 = vmatprep.subr.mxu0 0.0
    %2344 = vmatpush2.msra.mxu0 0.0
    %2345 = vmatprep.subr.mxu0 0.0
    %2346 = vmatpush2.msra.mxu0 0.0
    %2347 = vmatprep.subr.mxu0 0.0
    %2348 = vmatpush2.msra.mxu0 0.0
    %2349 = vmatprep.mubr.f32.mxu0 0.0
    %v2350 = vand.u32 %v1499, 4294901760
    %2351 = vmatmul.mubr.f32.gmra.mxu0 %v2350
    %v2352 = vpop.f32.mrf.mxu0
    %v2353 = vadd.f32 %v2275, %v2352
    %v2354 = vpop.f32.mrf.mxu0
    %v2355 = vadd.f32 %v2277, %v2354
    %2356 = vdwg.mxu0
    %2357 = vmatprep.subr.mxu0 0.0
    %2358 = vmatpush1.msra.mxu0 0.0
    %2359 = vmatprep.subr.mxu0 0.0
    %2360 = vmatpush1.msra.mxu0 0.0
    %2361 = vmatprep.subr.mxu0 0.0
    %2362 = vmatpush1.msra.mxu0 0.0
    %2363 = vmatprep.subr.mxu0 0.0
    %2364 = vmatpush1.msra.mxu0 0.0
    %2365 = vmatprep.subr.mxu0 0.0
    %2366 = vmatpush1.msra.mxu0 0.0
    %2367 = vmatprep.subr.mxu0 0.0
    %2368 = vmatpush1.msra.mxu0 0.0
    %2369 = vmatprep.subr.mxu0 0.0
    %2370 = vmatpush1.msra.mxu0 0.0
    %2371 = vmatprep.subr.mxu0 0.0
    %2372 = vmatpush1.msra.mxu0 0.0
    %2373 = vmatprep.subr.mxu0 0.0
    %2374 = vmatpush1.msra.mxu0 0.0
    %2375 = vmatprep.subr.mxu0 0.0
    %2376 = vmatpush1.msra.mxu0 0.0
    %2377 = vmatprep.subr.mxu0 0.0
    %2378 = vmatpush1.msra.mxu0 0.0
    %2379 = vmatprep.subr.mxu0 0.0
    %2380 = vmatpush1.msra.mxu0 0.0
    %2381 = vmatprep.subr.mxu0 0.0
    %2382 = vmatpush1.msra.mxu0 0.0
    %2383 = vmatprep.subr.mxu0 0.0
    %2384 = vmatpush1.msra.mxu0 0.0
    %2385 = vmatprep.subr.mxu0 0.0
    %2386 = vmatpush1.msra.mxu0 0.0
    %v2387 = vand.u32 %v1491, 4294901760
    %2388 = vmatprep.subr.mxu0 %v2387
    %v2389 = vand.u32 %v1490, 4294901760
    %2390 = vmatpush1.msra.mxu0 %v2389
    %2391 = vmatprep.subr.mxu0 0.0
    %2392 = vmatpush2.msra.mxu0 0.0
    %2393 = vmatprep.subr.mxu0 0.0
    %2394 = vmatpush2.msra.mxu0 0.0
    %2395 = vmatprep.subr.mxu0 0.0
    %2396 = vmatpush2.msra.mxu0 0.0
    %2397 = vmatprep.subr.mxu0 0.0
    %2398 = vmatpush2.msra.mxu0 0.0
    %2399 = vmatprep.subr.mxu0 0.0
    %2400 = vmatpush2.msra.mxu0 0.0
    %2401 = vmatprep.subr.mxu0 0.0
    %2402 = vmatpush2.msra.mxu0 0.0
    %2403 = vmatprep.subr.mxu0 0.0
    %2404 = vmatpush2.msra.mxu0 0.0
    %2405 = vmatprep.subr.mxu0 0.0
    %2406 = vmatpush2.msra.mxu0 0.0
    %2407 = vmatprep.subr.mxu0 0.0
    %2408 = vmatpush2.msra.mxu0 0.0
    %2409 = vmatprep.subr.mxu0 0.0
    %2410 = vmatpush2.msra.mxu0 0.0
    %2411 = vmatprep.subr.mxu0 0.0
    %2412 = vmatpush2.msra.mxu0 0.0
    %2413 = vmatprep.subr.mxu0 0.0
    %2414 = vmatpush2.msra.mxu0 0.0
    %2415 = vmatprep.subr.mxu0 0.0
    %2416 = vmatpush2.msra.mxu0 0.0
    %2417 = vmatprep.subr.mxu0 0.0
    %2418 = vmatpush2.msra.mxu0 0.0
    %2419 = vmatprep.subr.mxu0 0.0
    %2420 = vmatpush2.msra.mxu0 0.0
    %2421 = vmatprep.subr.mxu0 0.0
    %2422 = vmatpush2.msra.mxu0 0.0
    %2423 = vmatprep.mubr.f32.mxu0 0.0
    %v2424 = vand.u32 %v1499, 4294901760
    %2425 = vmatmul.mubr.f32.gmra.mxu0 %v2424
    %v2426 = vpop.f32.mrf.mxu0
    %v2427 = vadd.f32 %v2353, %v2426
    %v2428 = vpop.f32.mrf.mxu0
    %v2429 = vadd.f32 %v2355, %v2428
    %2430 = vdwg.mxu0
    %v2433 = vrot.slane %v2427, 4
    %v2434 = vrot.slane %v2429, 4
    %v2437 = vsel %vm361, %v1962, %v2433
    %v2438 = vsel %vm361, %v1964, %v2434
    %2439 = vst [vmem:[#allocation2] sm:$0xff] %v2437
    %2440 = vst [vmem:[#allocation2 + $0x8] sm:$0xff] %v2438
    // Predicated region
    $region10: #{tpu_custom_call.1} parent=1 // pred_check
      _
    $region11: #{tpu_custom_call.1} parent=1 // pred_check_branch
      %2442 = sbr.rel (0) target = $region13
    $region12: #{tpu_custom_call.1} parent=1 // pred_region
      %s2444 = ssub.s32 256, 256
      %2445 = vsyncadd [#allocation3], %s2444
      %s2447 = sshll.u32 [#allocation2], 4
      %s2448 = int_to_ptr.vmem [resolvable:$true] %s2447
      %2450 = dma.vmem_to_hbm [thread:$0]  %s2448, 256, %s2, [#allocation3]
    $region13: #{tpu_custom_call.1} parent=1 // pred_fallthru
      _
    // Predicated region
    $region14: #{tpu_custom_call.1} parent=1 // pred_check
      _
    $region15: #{tpu_custom_call.1} parent=1 // pred_check_branch
      %2452 = sbr.rel (0) target = $region17
    $region16: #{tpu_custom_call.1} parent=1 // pred_region
      %2453 = dma.done [#allocation3], 256
    $region17: #{tpu_custom_call.1} parent=1 // pred_fallthru
      _
    %2454 = vsyncpa [#allocation3], 1

</llo_original>
